<compile_context>
chip_gen: v6e
topology: v6e:2x2x1
jax: 0.10.0
libtpu: 0.0.40
codegen_flags: <defaults>
</compile_context>

<pallas_src>
import math

import jax
import jax.numpy as jnp
from jax import lax
from jax.experimental import pallas as pl
from jax.experimental.pallas import tpu as pltpu


_H = 7
_W = 7
_S = _H * _W            # 49 spatial tokens (hard-coded h=w=7 in the PyTorch module)
_LN_EPS = 1e-5


def _layernorm_f32(x, gamma, beta):
    x32 = x.astype(jnp.float32)
    mu = jnp.mean(x32, axis=-1, keepdims=True)
    var = jnp.mean(jnp.square(x32 - mu), axis=-1, keepdims=True)
    return (x32 - mu) * lax.rsqrt(var + _LN_EPS) * gamma.astype(jnp.float32) + beta.astype(jnp.float32)


# --------------------------------------------------------------------------------------
# Kernel A: Update module + to_k gate (q path; one row per batch element)
# --------------------------------------------------------------------------------------
def _update_gate_kernel(q_ref, oq_ref, oqv_ref,
                        wv_ref, bv_ref,
                        w1a_ref, w1b_ref, b1_ref,
                        w2q_ref, b2q_ref, w2k_ref, b2k_ref,
                        lng_ref, lnb_ref, wk_ref, bk_ref,
                        newk_ref, gate_ref):
    q = q_ref[...]          # (bt, dim)
    oq = oq_ref[...]
    oqv = oqv_ref[...]

    # Update.value : Linear(dim -> dim)
    val = jnp.dot(oqv, wv_ref[...], preferred_element_type=jnp.float32) \
        + bv_ref[...].astype(jnp.float32)

    # Update.query MLP; concat((q - oq, oq), -1) is folded into a split W1 (no lane concat).
    h = (jnp.dot(q - oq, w1a_ref[...], preferred_element_type=jnp.float32)
         + jnp.dot(oq, w1b_ref[...], preferred_element_type=jnp.float32)
         + b1_ref[...].astype(jnp.float32))
    h = h * jax.nn.sigmoid(h)                          # SiLU
    h = h.astype(w2q_ref.dtype)
    qu = jnp.dot(h, w2q_ref[...], preferred_element_type=jnp.float32) \
        + b2q_ref[...].astype(jnp.float32)
    ku = jnp.dot(h, w2k_ref[...], preferred_element_type=jnp.float32) \
        + b2k_ref[...].astype(jnp.float32)

    q32 = q.astype(jnp.float32)
    oq32 = oq.astype(jnp.float32)
    new_q = jax.nn.sigmoid(qu) * val + q32             # mean over L == 1 is the identity
    new_k = jax.nn.sigmoid(ku) * val + oq32
    newk_ref[...] = new_k.astype(newk_ref.dtype)

    # to_k : LayerNorm -> Linear(dim -> 49*heads) (columns pre-permuted to hw-major) -> sigmoid
    nq = _layernorm_f32(new_q, lng_ref[...], lnb_ref[...])
    kl = jnp.dot(nq.astype(wk_ref.dtype), wk_ref[...], preferred_element_type=jnp.float32) \
        + bk_ref[...].astype(jnp.float32)
    gate_ref[...] = jax.nn.sigmoid(kl).astype(gate_ref.dtype)


# --------------------------------------------------------------------------------------
# Kernel B: to_x / gating / to_v / to_n (x path; batch_tile*49 token rows per grid step)
# --------------------------------------------------------------------------------------
def _x_path_kernel(x_ref, gate_ref, q_ref,
                   lng_ref, lnb_ref, wx_ref, bx_ref,
                   e_ref, s_ref, wv_ref, wn_ref,
                   xo_ref, qo_ref):
    x = x_ref[...]                                      # (bt*49, dim)
    x32 = x.astype(jnp.float32)

    # to_x : LayerNorm -> Linear(dim -> heads*dim_head)
    xn = _layernorm_f32(x, lng_ref[...], lnb_ref[...])
    xl = jnp.dot(xn.astype(wx_ref.dtype), wx_ref[...], preferred_element_type=jnp.float32) \
        + bx_ref[...].astype(jnp.float32)

    # Broadcast the per-(token, head) gate over dim_head with a 0/1 expansion matmul (MXU work,
    # avoids any in-kernel reshape/relayout).
    gate_full = jnp.dot(gate_ref[...].astype(e_ref.dtype), e_ref[...],
                        preferred_element_type=jnp.float32)
    v2 = xl * gate_full                                 # (bt*49, inner), f32

    # to_v : Linear(inner -> dim, no bias) + residual on x
    xo = jnp.dot(v2.astype(wv_ref.dtype), wv_ref[...], preferred_element_type=jnp.float32) + x32
    xo_ref[...] = xo.astype(xo_ref.dtype)

    # to_n : per-batch spatial mean as a matmul with S, then Linear(inner -> dim) + residual on q
    vmean = jnp.dot(s_ref[...], v2, preferred_element_type=jnp.float32)        # (bt, inner)
    qo = jnp.dot(vmean.astype(wn_ref.dtype), wn_ref[...], preferred_element_type=jnp.float32) \
        + q_ref[...].astype(jnp.float32)
    qo_ref[...] = qo.astype(qo_ref.dtype)


# --------------------------------------------------------------------------------------
# Wrapper
# --------------------------------------------------------------------------------------
def _bytes(shape, dtype):
    return math.prod(shape) * jnp.dtype(dtype).itemsize


def _vmem_limit(stream_bytes, const_bytes):
    # streamed blocks are double-buffered, constants single-buffered; add headroom for
    # intermediates, clamp to a range that is safe on v5e / v6e / v7x.
    est = 2 * stream_bytes + const_bytes
    return int(min(48 * 1024 * 1024, max(32 * 1024 * 1024, 2 * est + 8 * 1024 * 1024)))


def _row_spec(rows, cols):
    return pl.BlockSpec((rows, cols), lambda i: (i, 0))


def _const_spec(shape):
    nd = len(shape)
    # Grid-invariant operand: single-buffered (no point double-buffering a constant block).
    return pl.BlockSpec(shape, lambda i: (0,) * nd, pipeline_mode=pl.Buffered(1))


def eb_forward(x, q, oq, oq_v, params, *, heads, dim_head, batch_tile=8):
    """Pallas TPU forward of EB.  x: (B, 49, dim); q, oq, oq_v: (B, 1, dim)."""
    B, S, dim = x.shape
    assert S == _S, f"EB hard-codes h = w = 7, so the spatial length must be {_S}"
    assert q.shape == (B, 1, dim) and oq.shape == (B, 1, dim) and oq_v.shape == (B, 1, dim), \
        "EB's value-gating / to_n assume a single query token (l == 1)"
    assert batch_tile % 8 == 0, "batch_tile must be a multiple of 8 (sublane tiling)"

    inner = heads * dim_head        # to_x / to_v / to_n width
    kdim = _S * heads               # to_k output width
    f32 = jnp.float32

    # ---- parameter plumbing (pure layout work, plain JAX, done once per call) ----
    w1 = params["w_q1"]                       # (2*dim, inner_u)
    w2 = params["w_q2"]                       # (inner_u, 2*dim)
    w1a, w1b = w1[:dim], w1[dim:]             # concat(q-oq, oq) folded into a split W1
    w2q, w2k = w2[:, :dim], w2[:, dim:]       # .chunk(2, dim=2) folded into a split W2
    b2q, b2k = params["b_q2"][:dim], params["b_q2"][dim:]

    # Permute to_k's output columns from head-major (n*49 + hw) to token-major (hw*heads + n)
    # so the gate can be consumed as (B*49, heads) rows via a free wrapper reshape.
    perm = (jnp.arange(heads)[None, :] * _S + jnp.arange(_S)[:, None]).reshape(-1)
    wk_p = params["w_k"][:, perm]
    bk_p = params["b_k"][perm]

    # 0/1 expansion matrix: (rows, heads) @ E -> (rows, heads*dim_head)
    expand = jnp.repeat(jnp.eye(heads, dtype=params["w_x"].dtype), dim_head, axis=1)
    # per-batch spatial-mean matrix inside one tile: (batch_tile, batch_tile*49)
    smean = jnp.repeat(jnp.eye(batch_tile, dtype=f32), _S, axis=1) / float(_S)

    as_row = lambda v: v.reshape(1, -1)

    # ---- pad the batch so it tiles evenly (padded rows are discarded at the end) ----
    Bp = ((B + batch_tile - 1) // batch_tile) * batch_tile

    def pad_b(a):
        if Bp == B:
            return a
        return jnp.concatenate([a, jnp.zeros((Bp - B,) + a.shape[1:], a.dtype)], axis=0)

    q2 = pad_b(q[:, 0, :])
    oq2 = pad_b(oq[:, 0, :])
    oqv2 = pad_b(oq_v[:, 0, :])
    x2 = pad_b(x).reshape(Bp * _S, dim)
    n_tiles = Bp // batch_tile

    # ------------------------------ kernel A: Update + to_k gate ------------------------------
    upd_consts = [params["w_val"], as_row(params["b_val"]),
                  w1a, w1b, as_row(params["b_q1"]),
                  w2q, as_row(b2q), w2k, as_row(b2k),
                  as_row(params["ln_k_g"]), as_row(params["ln_k_b"]),
                  wk_p, as_row(bk_p)]
    a_stream = 4 * _bytes((batch_tile, dim), q.dtype) + _bytes((batch_tile, kdim), f32)
    a_const = sum(_bytes(c.shape, c.dtype) for c in upd_consts)
    inner_u = w1.shape[1]
    a_cost = pl.CostEstimate(
        flops=2 * Bp * (dim * dim + 2 * dim * inner_u + inner_u * 2 * dim + dim * kdim),
        transcendentals=Bp * (inner_u + 2 * dim + kdim),
        bytes_accessed=n_tiles * (a_stream + a_const))

    newk2, gate2 = pl.pallas_call(
        _update_gate_kernel,
        out_shape=(jax.ShapeDtypeStruct((Bp, dim), q.dtype),
                   jax.ShapeDtypeStruct((Bp, kdim), f32)),
        grid_spec=pltpu.PrefetchScalarGridSpec(
            num_scalar_prefetch=0,
            grid=(n_tiles,),
            in_specs=[_row_spec(batch_tile, dim)] * 3
                     + [_const_spec(c.shape) for c in upd_consts],
            out_specs=[_row_spec(batch_tile, dim), _row_spec(batch_tile, kdim)],
        ),
        compiler_params=pltpu.CompilerParams(
            dimension_semantics=("parallel",),
            vmem_limit_bytes=_vmem_limit(a_stream, a_const)),
        cost_estimate=a_cost,
    )(q2, oq2, oqv2, *upd_consts)

    # gate2 columns are (hw*heads + n) -> a plain reshape gives one row per (batch, hw) token.
    gate_rows = gate2.reshape(Bp * _S, heads)

    # ------------------------------ kernel B: to_x / to_v / to_n ------------------------------
    x_consts = [as_row(params["ln_x_g"]), as_row(params["ln_x_b"]),
                params["w_x"], as_row(params["b_x"]),
                expand, smean, params["w_v"], params["w_n"]]
    rows = batch_tile * _S        # 392-row MXU tiles for the x path
    b_stream = (2 * _bytes((rows, dim), x.dtype) + _bytes((rows, heads), f32)
                + 2 * _bytes((batch_tile, dim), q.dtype))
    b_const = sum(_bytes(c.shape, c.dtype) for c in x_consts)
    b_cost = pl.CostEstimate(
        flops=2 * Bp * _S * (dim * inner + heads * inner + inner * dim)
              + 2 * Bp * (_S * inner + inner * dim),
        transcendentals=Bp * _S,
        bytes_accessed=n_tiles * (b_stream + b_const))

    xo2, qo2 = pl.pallas_call(
        _x_path_kernel,
        out_shape=(jax.ShapeDtypeStruct((Bp * _S, dim), x.dtype),
                   jax.ShapeDtypeStruct((Bp, dim), q.dtype)),
        grid_spec=pltpu.PrefetchScalarGridSpec(
            num_scalar_prefetch=0,
            grid=(n_tiles,),
            in_specs=[_row_spec(rows, dim), _row_spec(rows, heads), _row_spec(batch_tile, dim)]
                     + [_const_spec(c.shape) for c in x_consts],
            out_specs=[_row_spec(rows, dim), _row_spec(batch_tile, dim)],
        ),
        compiler_params=pltpu.CompilerParams(
            dimension_semantics=("parallel",),
            vmem_limit_bytes=_vmem_limit(b_stream, b_const)),
        cost_estimate=b_cost,
    )(x2, gate_rows, q2, *x_consts)

    x_out = xo2[:B * _S].reshape(B, _S, dim)
    q_out = qo2[:B].reshape(B, 1, dim)
    new_k = newk2[:B].reshape(B, 1, dim)
    return x_out, q_out, new_k


# --------------------------------------------------------------------------------------
# Pure-JAX reference (literal einops-style port of the PyTorch forward) for verification
# --------------------------------------------------------------------------------------
def reference_eb(x, q, oq, oq_v, params, *, heads, dim_head):
    B, S, dim = x.shape
    hp = lax.Precision.HIGHEST
    inner = heads * dim_head

    def ln(z, g, b):
        mu = z.mean(-1, keepdims=True)
        var = ((z - mu) ** 2).mean(-1, keepdims=True)
        return (z - mu) / jnp.sqrt(var + _LN_EPS) * g + b

    # Update
    val = jnp.dot(oq_v, params["w_val"], precision=hp) + params["b_val"]
    cat = jnp.concatenate([q - oq, oq], axis=-1)
    h = jnp.dot(cat, params["w_q1"], precision=hp) + params["b_q1"]
    h = h * jax.nn.sigmoid(h)                                  # SiLU
    out = jnp.dot(h, params["w_q2"], precision=hp) + params["b_q2"]
    qu, ku = out[..., :dim], out[..., dim:]
    new_q = jnp.mean(jax.nn.sigmoid(qu) * val, axis=1, keepdims=True) + q
    new_k = jax.nn.sigmoid(ku) * val + oq

    # to_k : 'b l (n h w) -> b n l h w'
    kl = jnp.dot(ln(new_q, params["ln_k_g"], params["ln_k_b"]), params["w_k"],
                 precision=hp) + params["b_k"]
    key = kl.reshape(B, 1, heads, _H, _W).transpose(0, 2, 1, 3, 4)

    # to_x : 'b (h w) (n c) -> b n c h w'
    xl = jnp.dot(ln(x, params["ln_x_g"], params["ln_x_b"]), params["w_x"],
                 precision=hp) + params["b_x"]
    tox = xl.reshape(B, _H, _W, heads, dim_head).transpose(0, 3, 4, 1, 2)

    value = tox * jax.nn.sigmoid(key)

    # to_v : 'b n c h w -> b (h w) (n c)' then Linear(inner -> dim, no bias) + x
    v2 = value.transpose(0, 3, 4, 1, 2).reshape(B, _S, inner)
    x_out = jnp.dot(v2, params["w_v"], precision=hp) + x

    # to_n : mean over (h, w) then Linear(inner -> dim, no bias) + q
    vmean = value.mean(axis=(3, 4)).reshape(B, 1, inner)
    q_out = jnp.dot(vmean, params["w_n"], precision=hp) + q

    return x_out, q_out, new_k


if __name__ == "__main__":
    key = jax.random.PRNGKey(0)
    # small demo shapes (h = w = 7 is fixed by the module); real deployments should pad
    # dim / heads*dim_head to multiples of 128 for fully lane-dense tiles.
    batch, dim, heads, dim_head = 16, 32, 4, 16
    inner = heads * dim_head
    inner_u = 4 * dim_head          # Update(dim, heads=4, dim_head=dim_head)
    kdim = _S * heads

    keys = jax.random.split(key, 20)
    rnd = lambda k, shape, s=0.1: jax.random.normal(k, shape, dtype=jnp.float32) * s

    x = rnd(keys[0], (batch, _S, dim), 1.0)
    q = rnd(keys[1], (batch, 1, dim), 1.0)
    oq = rnd(keys[2], (batch, 1, dim), 1.0)
    oq_v = rnd(keys[3], (batch, 1, dim), 1.0)

    params = dict(
        w_val=rnd(keys[4], (dim, dim)), b_val=rnd(keys[5], (dim,)),
        w_q1=rnd(keys[6], (2 * dim, inner_u)), b_q1=rnd(keys[7], (inner_u,)),
        w_q2=rnd(keys[8], (inner_u, 2 * dim)), b_q2=rnd(keys[9], (2 * dim,)),
        ln_k_g=1.0 + rnd(keys[10], (dim,)), ln_k_b=rnd(keys[11], (dim,)),
        w_k=rnd(keys[12], (dim, kdim)), b_k=rnd(keys[13], (kdim,)),
        ln_x_g=1.0 + rnd(keys[14], (dim,)), ln_x_b=rnd(keys[15], (dim,)),
        w_x=rnd(keys[16], (dim, inner)), b_x=rnd(keys[17], (inner,)),
        w_v=rnd(keys[18], (inner, dim)),
        w_n=rnd(keys[19], (inner, dim)),
    )

    x_out, q_out, new_k = eb_forward(x, q, oq, oq_v, params,
                                     heads=heads, dim_head=dim_head, batch_tile=8)
    x_out, q_out, new_k = jax.block_until_ready((x_out, q_out, new_k))

    x_exp, q_exp, k_exp = reference_eb(x, q, oq, oq_v, params, heads=heads, dim_head=dim_head)

    assert x_out.shape == (batch, _S, dim)
    assert q_out.shape == (batch, 1, dim)
    assert new_k.shape == (batch, 1, dim)
    assert jnp.allclose(x_out, x_exp, atol=5e-4, rtol=5e-4), "x mismatch vs reference"
    assert jnp.allclose(q_out, q_exp, atol=5e-4, rtol=5e-4), "q mismatch vs reference"
    assert jnp.allclose(new_k, k_exp, atol=5e-4, rtol=5e-4), "new_k mismatch vs reference"

    print("KERNEL_OK")
</pallas_src>

<mosaic_0001>
module attributes {stable_mosaic.version = 11 : i64} {
  func.func @_update_gate_kernel(%arg0: i32, %arg1: memref<8x32xf32, #tpu.memory_space<vmem>>, %arg2: memref<8x32xf32, #tpu.memory_space<vmem>>, %arg3: memref<8x32xf32, #tpu.memory_space<vmem>>, %arg4: memref<32x32xf32, #tpu.memory_space<vmem>>, %arg5: memref<1x32xf32, #tpu.memory_space<vmem>>, %arg6: memref<32x64xf32, #tpu.memory_space<vmem>>, %arg7: memref<32x64xf32, #tpu.memory_space<vmem>>, %arg8: memref<1x64xf32, #tpu.memory_space<vmem>>, %arg9: memref<64x32xf32, #tpu.memory_space<vmem>>, %arg10: memref<1x32xf32, #tpu.memory_space<vmem>>, %arg11: memref<64x32xf32, #tpu.memory_space<vmem>>, %arg12: memref<1x32xf32, #tpu.memory_space<vmem>>, %arg13: memref<1x32xf32, #tpu.memory_space<vmem>>, %arg14: memref<1x32xf32, #tpu.memory_space<vmem>>, %arg15: memref<32x196xf32, #tpu.memory_space<vmem>>, %arg16: memref<1x196xf32, #tpu.memory_space<vmem>>, %arg17: memref<8x32xf32, #tpu.memory_space<vmem>>, %arg18: memref<8x196xf32, #tpu.memory_space<vmem>>) attributes {dimension_semantics = [#tpu.dimension_semantics<parallel>], iteration_bounds = array<i64: 2>, scalar_prefetch = 0 : i64, scratch_operands = 0 : i64, tpu.core_type = #tpu.core_type<tc>, window_params = [{transform_indices = @transform_0, window_bounds = array<i64: 8, 32>}, {transform_indices = @transform_1, window_bounds = array<i64: 8, 32>}, {transform_indices = @transform_2, window_bounds = array<i64: 8, 32>}, {pipeline_mode = #tpu.pipeline_mode<synchronous>, transform_indices = @transform_3, window_bounds = array<i64: 32, 32>}, {pipeline_mode = #tpu.pipeline_mode<synchronous>, transform_indices = @transform_4, window_bounds = array<i64: 1, 32>}, {pipeline_mode = #tpu.pipeline_mode<synchronous>, transform_indices = @transform_5, window_bounds = array<i64: 32, 64>}, {pipeline_mode = #tpu.pipeline_mode<synchronous>, transform_indices = @transform_6, window_bounds = array<i64: 32, 64>}, {pipeline_mode = #tpu.pipeline_mode<synchronous>, transform_indices = @transform_7, window_bounds = array<i64: 1, 64>}, {pipeline_mode = #tpu.pipeline_mode<synchronous>, transform_indices = @transform_8, window_bounds = array<i64: 64, 32>}, {pipeline_mode = #tpu.pipeline_mode<synchronous>, transform_indices = @transform_9, window_bounds = array<i64: 1, 32>}, {pipeline_mode = #tpu.pipeline_mode<synchronous>, transform_indices = @transform_10, window_bounds = array<i64: 64, 32>}, {pipeline_mode = #tpu.pipeline_mode<synchronous>, transform_indices = @transform_11, window_bounds = array<i64: 1, 32>}, {pipeline_mode = #tpu.pipeline_mode<synchronous>, transform_indices = @transform_12, window_bounds = array<i64: 1, 32>}, {pipeline_mode = #tpu.pipeline_mode<synchronous>, transform_indices = @transform_13, window_bounds = array<i64: 1, 32>}, {pipeline_mode = #tpu.pipeline_mode<synchronous>, transform_indices = @transform_14, window_bounds = array<i64: 32, 196>}, {pipeline_mode = #tpu.pipeline_mode<synchronous>, transform_indices = @transform_15, window_bounds = array<i64: 1, 196>}, {transform_indices = @transform_16, window_bounds = array<i64: 8, 32>}, {transform_indices = @transform_17, window_bounds = array<i64: 8, 196>}]} {
    %c0 = arith.constant 0 : index
    %c0_0 = arith.constant 0 : index
    %0 = vector.load %arg1[%c0, %c0_0] : memref<8x32xf32, #tpu.memory_space<vmem>>, vector<8x32xf32>
    %c0_1 = arith.constant 0 : index
    %c0_2 = arith.constant 0 : index
    %1 = vector.load %arg2[%c0_1, %c0_2] : memref<8x32xf32, #tpu.memory_space<vmem>>, vector<8x32xf32>
    %c0_3 = arith.constant 0 : index
    %c0_4 = arith.constant 0 : index
    %2 = vector.load %arg3[%c0_3, %c0_4] : memref<8x32xf32, #tpu.memory_space<vmem>>, vector<8x32xf32>
    %c0_5 = arith.constant 0 : index
    %c0_6 = arith.constant 0 : index
    %3 = vector.load %arg4[%c0_5, %c0_6] : memref<32x32xf32, #tpu.memory_space<vmem>>, vector<32x32xf32>
    %cst = arith.constant dense<0.000000e+00> : vector<8x32xf32>
    %4 = tpu.matmul %2, %3, %cst {dimension_numbers = #tpu.dot_dimension_numbers<[1], [0], [0], [1], [0, 0, 1, 1], [], []>} : vector<8x32xf32>, vector<32x32xf32>, vector<8x32xf32> -> vector<8x32xf32>
    %c0_7 = arith.constant 0 : index
    %c0_8 = arith.constant 0 : index
    %5 = vector.load %arg5[%c0_7, %c0_8] : memref<1x32xf32, #tpu.memory_space<vmem>>, vector<1x32xf32>
    %6 = vector.broadcast %5 : vector<1x32xf32> to vector<8x32xf32>
    %7 = arith.addf %4, %6 : vector<8x32xf32>
    %8 = arith.subf %0, %1 : vector<8x32xf32>
    %c0_9 = arith.constant 0 : index
    %c0_10 = arith.constant 0 : index
    %9 = vector.load %arg6[%c0_9, %c0_10] : memref<32x64xf32, #tpu.memory_space<vmem>>, vector<32x64xf32>
    %cst_11 = arith.constant dense<0.000000e+00> : vector<8x64xf32>
    %10 = tpu.matmul %8, %9, %cst_11 {dimension_numbers = #tpu.dot_dimension_numbers<[1], [0], [0], [1], [0, 0, 1, 1], [], []>} : vector<8x32xf32>, vector<32x64xf32>, vector<8x64xf32> -> vector<8x64xf32>
    %c0_12 = arith.constant 0 : index
    %c0_13 = arith.constant 0 : index
    %11 = vector.load %arg7[%c0_12, %c0_13] : memref<32x64xf32, #tpu.memory_space<vmem>>, vector<32x64xf32>
    %cst_14 = arith.constant dense<0.000000e+00> : vector<8x64xf32>
    %12 = tpu.matmul %1, %11, %cst_14 {dimension_numbers = #tpu.dot_dimension_numbers<[1], [0], [0], [1], [0, 0, 1, 1], [], []>} : vector<8x32xf32>, vector<32x64xf32>, vector<8x64xf32> -> vector<8x64xf32>
    %13 = arith.addf %10, %12 : vector<8x64xf32>
    %c0_15 = arith.constant 0 : index
    %c0_16 = arith.constant 0 : index
    %14 = vector.load %arg8[%c0_15, %c0_16] : memref<1x64xf32, #tpu.memory_space<vmem>>, vector<1x64xf32>
    %15 = vector.broadcast %14 : vector<1x64xf32> to vector<8x64xf32>
    %16 = arith.addf %13, %15 : vector<8x64xf32>
    %17 = arith.negf %16 : vector<8x64xf32>
    %18 = math.exp %17 : vector<8x64xf32>
    %cst_17 = arith.constant 1.000000e+00 : f32
    %19 = vector.broadcast %cst_17 : f32 to vector<8x64xf32>
    %20 = arith.addf %19, %18 : vector<8x64xf32>
    %21 = arith.divf %19, %20 : vector<8x64xf32>
    %22 = arith.mulf %16, %21 : vector<8x64xf32>
    %c0_18 = arith.constant 0 : index
    %c0_19 = arith.constant 0 : index
    %23 = vector.load %arg9[%c0_18, %c0_19] : memref<64x32xf32, #tpu.memory_space<vmem>>, vector<64x32xf32>
    %cst_20 = arith.constant dense<0.000000e+00> : vector<8x32xf32>
    %24 = tpu.matmul %22, %23, %cst_20 {dimension_numbers = #tpu.dot_dimension_numbers<[1], [0], [0], [1], [0, 0, 1, 1], [], []>} : vector<8x64xf32>, vector<64x32xf32>, vector<8x32xf32> -> vector<8x32xf32>
    %c0_21 = arith.constant 0 : index
    %c0_22 = arith.constant 0 : index
    %25 = vector.load %arg10[%c0_21, %c0_22] : memref<1x32xf32, #tpu.memory_space<vmem>>, vector<1x32xf32>
    %26 = vector.broadcast %25 : vector<1x32xf32> to vector<8x32xf32>
    %27 = arith.addf %24, %26 : vector<8x32xf32>
    %c0_23 = arith.constant 0 : index
    %c0_24 = arith.constant 0 : index
    %28 = vector.load %arg11[%c0_23, %c0_24] : memref<64x32xf32, #tpu.memory_space<vmem>>, vector<64x32xf32>
    %cst_25 = arith.constant dense<0.000000e+00> : vector<8x32xf32>
    %29 = tpu.matmul %22, %28, %cst_25 {dimension_numbers = #tpu.dot_dimension_numbers<[1], [0], [0], [1], [0, 0, 1, 1], [], []>} : vector<8x64xf32>, vector<64x32xf32>, vector<8x32xf32> -> vector<8x32xf32>
    %c0_26 = arith.constant 0 : index
    %c0_27 = arith.constant 0 : index
    %30 = vector.load %arg12[%c0_26, %c0_27] : memref<1x32xf32, #tpu.memory_space<vmem>>, vector<1x32xf32>
    %31 = vector.broadcast %30 : vector<1x32xf32> to vector<8x32xf32>
    %32 = arith.addf %29, %31 : vector<8x32xf32>
    %33 = arith.negf %27 : vector<8x32xf32>
    %34 = math.exp %33 : vector<8x32xf32>
    %cst_28 = arith.constant 1.000000e+00 : f32
    %35 = vector.broadcast %cst_28 : f32 to vector<8x32xf32>
    %36 = arith.addf %35, %34 : vector<8x32xf32>
    %37 = arith.divf %35, %36 : vector<8x32xf32>
    %38 = arith.mulf %37, %7 : vector<8x32xf32>
    %39 = arith.addf %38, %0 : vector<8x32xf32>
    %40 = arith.negf %32 : vector<8x32xf32>
    %41 = math.exp %40 : vector<8x32xf32>
    %cst_29 = arith.constant 1.000000e+00 : f32
    %42 = vector.broadcast %cst_29 : f32 to vector<8x32xf32>
    %43 = arith.addf %42, %41 : vector<8x32xf32>
    %44 = arith.divf %42, %43 : vector<8x32xf32>
    %45 = arith.mulf %44, %7 : vector<8x32xf32>
    %46 = arith.addf %45, %1 : vector<8x32xf32>
    %c0_30 = arith.constant 0 : index
    %c0_31 = arith.constant 0 : index
    %47 = vector.load %arg17[%c0_30, %c0_31] : memref<8x32xf32, #tpu.memory_space<vmem>>, vector<8x32xf32>
    tpu.vector_store %arg17[%c0_30, %c0_31], %46 {strides = array<i32>} : memref<8x32xf32, #tpu.memory_space<vmem>>, vector<8x32xf32>,
    %c0_32 = arith.constant 0 : index
    %c0_33 = arith.constant 0 : index
    %48 = vector.load %arg13[%c0_32, %c0_33] : memref<1x32xf32, #tpu.memory_space<vmem>>, vector<1x32xf32>
    %c0_34 = arith.constant 0 : index
    %c0_35 = arith.constant 0 : index
    %49 = vector.load %arg14[%c0_34, %c0_35] : memref<1x32xf32, #tpu.memory_space<vmem>>, vector<1x32xf32>
    %cst_36 = arith.constant dense<0.000000e+00> : vector<8xf32>
    %50 = vector.multi_reduction <add>, %39, %cst_36 [1] : vector<8x32xf32> to vector<8xf32>
    %51 = vector.shape_cast %50 : vector<8xf32> to vector<8x1xf32>
    %cst_37 = arith.constant 3.200000e+01 : f32
    %52 = vector.broadcast %cst_37 : f32 to vector<8x1xf32>
    %53 = arith.divf %51, %52 : vector<8x1xf32>
    %54 = vector.broadcast %53 : vector<8x1xf32> to vector<8x32xf32>
    %55 = arith.subf %39, %54 : vector<8x32xf32>
    %56 = arith.mulf %55, %55 : vector<8x32xf32>
    %cst_38 = arith.constant dense<0.000000e+00> : vector<8xf32>
    %57 = vector.multi_reduction <add>, %56, %cst_38 [1] : vector<8x32xf32> to vector<8xf32>
    %58 = vector.shape_cast %57 : vector<8xf32> to vector<8x1xf32>
    %cst_39 = arith.constant 3.200000e+01 : f32
    %59 = vector.broadcast %cst_39 : f32 to vector<8x1xf32>
    %60 = arith.divf %58, %59 : vector<8x1xf32>
    %61 = vector.broadcast %53 : vector<8x1xf32> to vector<8x32xf32>
    %62 = arith.subf %39, %61 : vector<8x32xf32>
    %cst_40 = arith.constant 9.99999974E-6 : f32
    %63 = vector.broadcast %cst_40 : f32 to vector<8x1xf32>
    %64 = arith.addf %60, %63 : vector<8x1xf32>
    %65 = math.rsqrt %64 : vector<8x1xf32>
    %66 = vector.broadcast %65 : vector<8x1xf32> to vector<8x32xf32>
    %67 = arith.mulf %62, %66 : vector<8x32xf32>
    %68 = vector.broadcast %48 : vector<1x32xf32> to vector<8x32xf32>
    %69 = arith.mulf %67, %68 : vector<8x32xf32>
    %70 = vector.broadcast %49 : vector<1x32xf32> to vector<8x32xf32>
    %71 = arith.addf %69, %70 : vector<8x32xf32>
    %c0_41 = arith.constant 0 : index
    %c0_42 = arith.constant 0 : index
    %72 = vector.load %arg15[%c0_41, %c0_42] : memref<32x196xf32, #tpu.memory_space<vmem>>, vector<32x196xf32>
    %cst_43 = arith.constant dense<0.000000e+00> : vector<8x196xf32>
    %73 = tpu.matmul %71, %72, %cst_43 {dimension_numbers = #tpu.dot_dimension_numbers<[1], [0], [0], [1], [0, 0, 1, 1], [], []>} : vector<8x32xf32>, vector<32x196xf32>, vector<8x196xf32> -> vector<8x196xf32>
    %c0_44 = arith.constant 0 : index
    %c0_45 = arith.constant 0 : index
    %74 = vector.load %arg16[%c0_44, %c0_45] : memref<1x196xf32, #tpu.memory_space<vmem>>, vector<1x196xf32>
    %75 = vector.broadcast %74 : vector<1x196xf32> to vector<8x196xf32>
    %76 = arith.addf %73, %75 : vector<8x196xf32>
    %77 = arith.negf %76 : vector<8x196xf32>
    %78 = math.exp %77 : vector<8x196xf32>
    %cst_46 = arith.constant 1.000000e+00 : f32
    %79 = vector.broadcast %cst_46 : f32 to vector<8x196xf32>
    %80 = arith.addf %79, %78 : vector<8x196xf32>
    %81 = arith.divf %79, %80 : vector<8x196xf32>
    %c0_47 = arith.constant 0 : index
    %c0_48 = arith.constant 0 : index
    %82 = vector.load %arg18[%c0_47, %c0_48] : memref<8x196xf32, #tpu.memory_space<vmem>>, vector<8x196xf32>
    tpu.vector_store %arg18[%c0_47, %c0_48], %81 {strides = array<i32>} : memref<8x196xf32, #tpu.memory_space<vmem>>, vector<8x196xf32>,
    return
  }
  func.func @transform_0(%arg0: i32) -> (i32, i32) {
    %c0_i32 = arith.constant 0 : i32
    %c0_i32_0 = arith.constant 0 : i32
    return %arg0, %c0_i32 : i32, i32
  }
  func.func @transform_1(%arg0: i32) -> (i32, i32) {
    %c0_i32 = arith.constant 0 : i32
    %c0_i32_0 = arith.constant 0 : i32
    return %arg0, %c0_i32 : i32, i32
  }
  func.func @transform_2(%arg0: i32) -> (i32, i32) {
    %c0_i32 = arith.constant 0 : i32
    %c0_i32_0 = arith.constant 0 : i32
    return %arg0, %c0_i32 : i32, i32
  }
  func.func @transform_3(%arg0: i32) -> (i32, i32) {
    %c0_i32 = arith.constant 0 : i32
    %c0_i32_0 = arith.constant 0 : i32
    %c0_i32_1 = arith.constant 0 : i32
    return %c0_i32, %c0_i32_0 : i32, i32
  }
  func.func @transform_4(%arg0: i32) -> (i32, i32) {
    %c0_i32 = arith.constant 0 : i32
    %c0_i32_0 = arith.constant 0 : i32
    %c0_i32_1 = arith.constant 0 : i32
    return %c0_i32, %c0_i32_0 : i32, i32
  }
  func.func @transform_5(%arg0: i32) -> (i32, i32) {
    %c0_i32 = arith.constant 0 : i32
    %c0_i32_0 = arith.constant 0 : i32
    %c0_i32_1 = arith.constant 0 : i32
    return %c0_i32, %c0_i32_0 : i32, i32
  }
  func.func @transform_6(%arg0: i32) -> (i32, i32) {
    %c0_i32 = arith.constant 0 : i32
    %c0_i32_0 = arith.constant 0 : i32
    %c0_i32_1 = arith.constant 0 : i32
    return %c0_i32, %c0_i32_0 : i32, i32
  }
  func.func @transform_7(%arg0: i32) -> (i32, i32) {
    %c0_i32 = arith.constant 0 : i32
    %c0_i32_0 = arith.constant 0 : i32
    %c0_i32_1 = arith.constant 0 : i32
    return %c0_i32, %c0_i32_0 : i32, i32
  }
  func.func @transform_8(%arg0: i32) -> (i32, i32) {
    %c0_i32 = arith.constant 0 : i32
    %c0_i32_0 = arith.constant 0 : i32
    %c0_i32_1 = arith.constant 0 : i32
    return %c0_i32, %c0_i32_0 : i32, i32
  }
  func.func @transform_9(%arg0: i32) -> (i32, i32) {
    %c0_i32 = arith.constant 0 : i32
    %c0_i32_0 = arith.constant 0 : i32
    %c0_i32_1 = arith.constant 0 : i32
    return %c0_i32, %c0_i32_0 : i32, i32
  }
  func.func @transform_10(%arg0: i32) -> (i32, i32) {
    %c0_i32 = arith.constant 0 : i32
    %c0_i32_0 = arith.constant 0 : i32
    %c0_i32_1 = arith.constant 0 : i32
    return %c0_i32, %c0_i32_0 : i32, i32
  }
  func.func @transform_11(%arg0: i32) -> (i32, i32) {
    %c0_i32 = arith.constant 0 : i32
    %c0_i32_0 = arith.constant 0 : i32
    %c0_i32_1 = arith.constant 0 : i32
    return %c0_i32, %c0_i32_0 : i32, i32
  }
  func.func @transform_12(%arg0: i32) -> (i32, i32) {
    %c0_i32 = arith.constant 0 : i32
    %c0_i32_0 = arith.constant 0 : i32
    %c0_i32_1 = arith.constant 0 : i32
    return %c0_i32, %c0_i32_0 : i32, i32
  }
  func.func @transform_13(%arg0: i32) -> (i32, i32) {
    %c0_i32 = arith.constant 0 : i32
    %c0_i32_0 = arith.constant 0 : i32
    %c0_i32_1 = arith.constant 0 : i32
    return %c0_i32, %c0_i32_0 : i32, i32
  }
  func.func @transform_14(%arg0: i32) -> (i32, i32) {
    %c0_i32 = arith.constant 0 : i32
    %c0_i32_0 = arith.constant 0 : i32
    %c0_i32_1 = arith.constant 0 : i32
    return %c0_i32, %c0_i32_0 : i32, i32
  }
  func.func @transform_15(%arg0: i32) -> (i32, i32) {
    %c0_i32 = arith.constant 0 : i32
    %c0_i32_0 = arith.constant 0 : i32
    %c0_i32_1 = arith.constant 0 : i32
    return %c0_i32, %c0_i32_0 : i32, i32
  }
  func.func @transform_16(%arg0: i32) -> (i32, i32) {
    %c0_i32 = arith.constant 0 : i32
    %c0_i32_0 = arith.constant 0 : i32
    return %arg0, %c0_i32 : i32, i32
  }
  func.func @transform_17(%arg0: i32) -> (i32, i32) {
    %c0_i32 = arith.constant 0 : i32
    %c0_i32_0 = arith.constant 0 : i32
    return %arg0, %c0_i32 : i32, i32
  }
}

</mosaic_0001>

<llo_original>
// kernel: tpu_custom_call.1
$region0: #{tpu_custom_call.1}
  #allocation0 [shape = 'u32[]', space=smem, size = 0x4, offset = 0x4, fixed_abs, tag = 'smem constant byte address 0x4 - core index']
  #allocation1 [shape = 'u32[144,128]{1,0:T(1,128)}', space=vmem, size = 0x12000, scoped, tag = 'internal scratch']
  %s0 = inlined_call_operand.hbm [shape: f32[16,32], index: 0, kind: input, shape index: {}]
  %s1 = inlined_call_operand.hbm [shape: f32[16,32], index: 1, kind: input, shape index: {}]
  %s2 = inlined_call_operand.hbm [shape: f32[16,32], index: 2, kind: input, shape index: {}]
  %s3 = inlined_call_operand.vmem [shape: f32[32,32], index: 3, kind: input, shape index: {}]
  %s4 = inlined_call_operand.vmem [shape: f32[1,32], index: 4, kind: input, shape index: {}]
  %s5 = inlined_call_operand.vmem [shape: f32[32,64], index: 5, kind: input, shape index: {}]
  %s6 = inlined_call_operand.vmem [shape: f32[32,64], index: 6, kind: input, shape index: {}]
  %s7 = inlined_call_operand.vmem [shape: f32[1,64], index: 7, kind: input, shape index: {}]
  %s8 = inlined_call_operand.vmem [shape: f32[64,32], index: 8, kind: input, shape index: {}]
  %s9 = inlined_call_operand.vmem [shape: f32[1,32], index: 9, kind: input, shape index: {}]
  %s10 = inlined_call_operand.vmem [shape: f32[64,32], index: 10, kind: input, shape index: {}]
  %s11 = inlined_call_operand.vmem [shape: f32[1,32], index: 11, kind: input, shape index: {}]
  %s12 = inlined_call_operand.vmem [shape: f32[1,32], index: 12, kind: input, shape index: {}]
  %s13 = inlined_call_operand.vmem [shape: f32[1,32], index: 13, kind: input, shape index: {}]
  %s14 = inlined_call_operand.vmem [shape: f32[32,196], index: 14, kind: input, shape index: {}]
  %s15 = inlined_call_operand.vmem [shape: f32[1,196], index: 15, kind: input, shape index: {}]
  %s16 = inlined_call_operand.hbm [shape: f32[16,32], index: 16, kind: output, shape index: {0}]
  %s17 = inlined_call_operand.hbm [shape: f32[16,196], index: 17, kind: output, shape index: {1}]
  %18 = xla_tuple %s16, %s17
  %s19 = sld [smem:[#allocation0]]
  $region117: #{tpu_custom_call.1} parent=0
    _
  %s21 = ssub.s32 1, %s19
  %s22 = scalar_select 0, %s21, %s19
  $region1: #{tpu_custom_call.1} parent=0
    #allocation2 [shape = 'u8[8192]{0}', space=vmem, size = 0x2000, scoped, tag = 'input window, operand 0']
    #allocation3 [shape = 's32[2]{0}', space=sflag, size = 0x8, scoped, tag = 'scoped memory for tpu_custom_call.1']
    #allocation4 [shape = 's32[2]{0}', space=sflag, size = 0x8, scoped, tag = 'scoped memory for tpu_custom_call.1']
    #allocation5 [shape = 'u8[8192]{0}', space=vmem, size = 0x2000, scoped, tag = 'input window, operand 1']
    #allocation6 [shape = 's32[2]{0}', space=sflag, size = 0x8, scoped, tag = 'scoped memory for tpu_custom_call.1']
    #allocation7 [shape = 'u8[8192]{0}', space=vmem, size = 0x2000, scoped, tag = 'input window, operand 2']
    #allocation8 [shape = 'u8[8192]{0}', space=vmem, size = 0x2000, scoped, tag = 'output window, operand 0']
    #allocation9 [shape = 'u8[16384]{0}', space=vmem, size = 0x4000, scoped, tag = 'output window, operand 1']
    #allocation10 [shape = 's32[2]{0}', space=sflag, size = 0x8, scoped, tag = 'scoped memory for tpu_custom_call.1']
    %23 = vsyncpa [#allocation3], 0
    %s24 = scalar_lea.sflag [#allocation3], 1
    %25 = vsyncpa %s24, 0
    %26 = vsyncpa [#allocation6], 0
    %s27 = scalar_lea.sflag [#allocation6], 1
    %28 = vsyncpa %s27, 0
    %29 = vsyncpa [#allocation4], 0
    %s30 = scalar_lea.sflag [#allocation4], 1
    %31 = vsyncpa %s30, 0
    %32 = vsyncpa [#allocation10], 0
    %s33 = scalar_lea.sflag [#allocation10], 1
    %34 = vsyncpa %s33, 0
    loop: start=0, step=1, limit=4
    $region2: #{tpu_custom_call.1} parent=1 // loop_pre_header
      _
    $region3: #{tpu_custom_call.1} parent=1 // loop_header
      %s36 = sphi 0, %s40
      %p37 = scmp.ge.s32.totalorder %s36, 4
      %s46 = sphi 0, %s48
      %s49 = sphi 0, %s46
      %s50 = sphi 0, %s49
      %s66 = sphi 0, %s50
      %s72 = sphi 0, %s74
      %s75 = sphi 0, %s72
      %s76 = sphi 0, %s75
      %s92 = sphi 0, %s76
      %s98 = sphi 0, %s100
      %s101 = sphi 0, %s98
      %s102 = sphi 0, %s101
      %s118 = sphi 0, %s102
      %s122 = sphi 0, %s122
      %s124 = sphi 0, %s122
      %s125 = sphi 0, %s124
      %s139 = sphi 0, %s125
      %s143 = sphi 0, %s143
      %s145 = sphi 0, %s143
      %s146 = sphi 0, %s145
      %s160 = sphi 0, %s146
      %s164 = sphi 0, %s164
      %s166 = sphi 0, %s164
      %s167 = sphi 0, %s166
      %s181 = sphi 0, %s167
      %s185 = sphi 0, %s185
      %s187 = sphi 0, %s185
      %s188 = sphi 0, %s187
      %s202 = sphi 0, %s188
      %s206 = sphi 0, %s206
      %s208 = sphi 0, %s206
      %s209 = sphi 0, %s208
      %s223 = sphi 0, %s209
      %s227 = sphi 0, %s227
      %s229 = sphi 0, %s227
      %s230 = sphi 0, %s229
      %s244 = sphi 0, %s230
      %s248 = sphi 0, %s248
      %s250 = sphi 0, %s248
      %s251 = sphi 0, %s250
      %s265 = sphi 0, %s251
      %s269 = sphi 0, %s269
      %s271 = sphi 0, %s269
      %s272 = sphi 0, %s271
      %s286 = sphi 0, %s272
      %s290 = sphi 0, %s290
      %s292 = sphi 0, %s290
      %s293 = sphi 0, %s292
      %s307 = sphi 0, %s293
      %s311 = sphi 0, %s311
      %s313 = sphi 0, %s311
      %s314 = sphi 0, %s313
      %s328 = sphi 0, %s314
      %s332 = sphi 0, %s332
      %s334 = sphi 0, %s332
      %s335 = sphi 0, %s334
      %s349 = sphi 0, %s335
      %s353 = sphi 0, %s353
      %s355 = sphi 0, %s353
      %s356 = sphi 0, %s355
      %s370 = sphi 0, %s356
      %s374 = sphi 0, %s374
      %s376 = sphi 0, %s374
      %s377 = sphi 0, %s376
      %s391 = sphi 0, %s377
      %s397 = sphi 0, %s399
      %s400 = sphi 0, %s397
      %s401 = sphi 0, %s400
      %s417 = sphi 0, %s401
      %s423 = sphi 0, %s425
      %s426 = sphi 0, %s423
      %s427 = sphi 0, %s426
      %s443 = sphi 0, %s427
    $region4: #{tpu_custom_call.1} parent=1 // loop_header_branch
      %39 = sbr.rel (%p37) target = $region8
    $region5: #{tpu_custom_call.1} parent=1 // loop_body
      %s41 = ssub.s32 %s36, 1
      %s42 = ssub.s32 %s36, 2
      %s43 = sadd.s32 %s36, 1
      %s44 = ssub.s32 %s36, %s43
      %p45 = scmp.eq.s32.totalorder %s44, 0
      %s47 = sadd.s32 %s46, 1
      %s48 = scalar_select %p45, %s46, %s47
      %p51 = pneg %p45
      %p52 = scmp.eq.s32.totalorder %s36, 1
      %p53 = por %p51, %p52
      %p54 = scmp.ne.s32.totalorder %s46, %s49
      %p55 = scmp.eq.s32.totalorder %s36, 0
      %p56 = por %p54, %p55
      %p57 = scmp.ne.s32.totalorder %s46, %s49
      %p58 = scmp.eq.s32.totalorder %s41, 1
      %p59 = por %p57, %p58
      %p60 = scmp.ne.s32.totalorder %s49, %s50
      %p61 = scmp.eq.s32.totalorder %s41, 0
      %p62 = por %p60, %p61
      %p63 = scmp.ne.s32.totalorder %s49, %s50
      %p64 = scmp.eq.s32.totalorder %s42, 1
      %p65 = por %p63, %p64
      %p67 = scmp.ne.s32.totalorder %s50, %s66
      %p68 = scmp.eq.s32.totalorder %s42, 0
      %p69 = por %p67, %p68
      %s70 = ssub.s32 %s36, %s43
      %p71 = scmp.eq.s32.totalorder %s70, 0
      %s73 = sadd.s32 %s72, 1
      %s74 = scalar_select %p71, %s72, %s73
      %p77 = pneg %p71
      %p78 = scmp.eq.s32.totalorder %s36, 1
      %p79 = por %p77, %p78
      %p80 = scmp.ne.s32.totalorder %s72, %s75
      %p81 = scmp.eq.s32.totalorder %s36, 0
      %p82 = por %p80, %p81
      %p83 = scmp.ne.s32.totalorder %s72, %s75
      %p84 = scmp.eq.s32.totalorder %s41, 1
      %p85 = por %p83, %p84
      %p86 = scmp.ne.s32.totalorder %s75, %s76
      %p87 = scmp.eq.s32.totalorder %s41, 0
      %p88 = por %p86, %p87
      %p89 = scmp.ne.s32.totalorder %s75, %s76
      %p90 = scmp.eq.s32.totalorder %s42, 1
      %p91 = por %p89, %p90
      %p93 = scmp.ne.s32.totalorder %s76, %s92
      %p94 = scmp.eq.s32.totalorder %s42, 0
      %p95 = por %p93, %p94
      %s96 = ssub.s32 %s36, %s43
      %p97 = scmp.eq.s32.totalorder %s96, 0
      %s99 = sadd.s32 %s98, 1
      %s100 = scalar_select %p97, %s98, %s99
      %p103 = pneg %p97
      %p104 = scmp.eq.s32.totalorder %s36, 1
      %p105 = por %p103, %p104
      %p106 = scmp.ne.s32.totalorder %s98, %s101
      %p107 = scmp.eq.s32.totalorder %s36, 0
      %p108 = por %p106, %p107
      %p109 = scmp.ne.s32.totalorder %s98, %s101
      %p110 = scmp.eq.s32.totalorder %s41, 1
      %p111 = por %p109, %p110
      %p112 = scmp.ne.s32.totalorder %s101, %s102
      %p113 = scmp.eq.s32.totalorder %s41, 0
      %p114 = por %p112, %p113
      %p115 = scmp.ne.s32.totalorder %s101, %s102
      %p116 = scmp.eq.s32.totalorder %s42, 1
      %p117 = por %p115, %p116
      %p119 = scmp.ne.s32.totalorder %s102, %s118
      %p120 = scmp.eq.s32.totalorder %s42, 0
      %p121 = por %p119, %p120
      %s123 = sadd.s32 %s122, 1
      %p126 = scmp.eq.s32.totalorder %s36, 1
      %p127 = scmp.ne.s32.totalorder %s122, %s124
      %p128 = scmp.eq.s32.totalorder %s36, 0
      %p129 = por %p127, %p128
      %p130 = scmp.ne.s32.totalorder %s122, %s124
      %p131 = scmp.eq.s32.totalorder %s41, 1
      %p132 = por %p130, %p131
      %p133 = scmp.ne.s32.totalorder %s124, %s125
      %p134 = scmp.eq.s32.totalorder %s41, 0
      %p135 = por %p133, %p134
      %p136 = scmp.ne.s32.totalorder %s124, %s125
      %p137 = scmp.eq.s32.totalorder %s42, 1
      %p138 = por %p136, %p137
      %p140 = scmp.ne.s32.totalorder %s125, %s139
      %p141 = scmp.eq.s32.totalorder %s42, 0
      %p142 = por %p140, %p141
      %s144 = sadd.s32 %s143, 1
      %p147 = scmp.eq.s32.totalorder %s36, 1
      %p148 = scmp.ne.s32.totalorder %s143, %s145
      %p149 = scmp.eq.s32.totalorder %s36, 0
      %p150 = por %p148, %p149
      %p151 = scmp.ne.s32.totalorder %s143, %s145
      %p152 = scmp.eq.s32.totalorder %s41, 1
      %p153 = por %p151, %p152
      %p154 = scmp.ne.s32.totalorder %s145, %s146
      %p155 = scmp.eq.s32.totalorder %s41, 0
      %p156 = por %p154, %p155
      %p157 = scmp.ne.s32.totalorder %s145, %s146
      %p158 = scmp.eq.s32.totalorder %s42, 1
      %p159 = por %p157, %p158
      %p161 = scmp.ne.s32.totalorder %s146, %s160
      %p162 = scmp.eq.s32.totalorder %s42, 0
      %p163 = por %p161, %p162
      %s165 = sadd.s32 %s164, 1
      %p168 = scmp.eq.s32.totalorder %s36, 1
      %p169 = scmp.ne.s32.totalorder %s164, %s166
      %p170 = scmp.eq.s32.totalorder %s36, 0
      %p171 = por %p169, %p170
      %p172 = scmp.ne.s32.totalorder %s164, %s166
      %p173 = scmp.eq.s32.totalorder %s41, 1
      %p174 = por %p172, %p173
      %p175 = scmp.ne.s32.totalorder %s166, %s167
      %p176 = scmp.eq.s32.totalorder %s41, 0
      %p177 = por %p175, %p176
      %p178 = scmp.ne.s32.totalorder %s166, %s167
      %p179 = scmp.eq.s32.totalorder %s42, 1
      %p180 = por %p178, %p179
      %p182 = scmp.ne.s32.totalorder %s167, %s181
      %p183 = scmp.eq.s32.totalorder %s42, 0
      %p184 = por %p182, %p183
      %s186 = sadd.s32 %s185, 1
      %p189 = scmp.eq.s32.totalorder %s36, 1
      %p190 = scmp.ne.s32.totalorder %s185, %s187
      %p191 = scmp.eq.s32.totalorder %s36, 0
      %p192 = por %p190, %p191
      %p193 = scmp.ne.s32.totalorder %s185, %s187
      %p194 = scmp.eq.s32.totalorder %s41, 1
      %p195 = por %p193, %p194
      %p196 = scmp.ne.s32.totalorder %s187, %s188
      %p197 = scmp.eq.s32.totalorder %s41, 0
      %p198 = por %p196, %p197
      %p199 = scmp.ne.s32.totalorder %s187, %s188
      %p200 = scmp.eq.s32.totalorder %s42, 1
      %p201 = por %p199, %p200
      %p203 = scmp.ne.s32.totalorder %s188, %s202
      %p204 = scmp.eq.s32.totalorder %s42, 0
      %p205 = por %p203, %p204
      %s207 = sadd.s32 %s206, 1
      %p210 = scmp.eq.s32.totalorder %s36, 1
      %p211 = scmp.ne.s32.totalorder %s206, %s208
      %p212 = scmp.eq.s32.totalorder %s36, 0
      %p213 = por %p211, %p212
      %p214 = scmp.ne.s32.totalorder %s206, %s208
      %p215 = scmp.eq.s32.totalorder %s41, 1
      %p216 = por %p214, %p215
      %p217 = scmp.ne.s32.totalorder %s208, %s209
      %p218 = scmp.eq.s32.totalorder %s41, 0
      %p219 = por %p217, %p218
      %p220 = scmp.ne.s32.totalorder %s208, %s209
      %p221 = scmp.eq.s32.totalorder %s42, 1
      %p222 = por %p220, %p221
      %p224 = scmp.ne.s32.totalorder %s209, %s223
      %p225 = scmp.eq.s32.totalorder %s42, 0
      %p226 = por %p224, %p225
      %s228 = sadd.s32 %s227, 1
      %p231 = scmp.eq.s32.totalorder %s36, 1
      %p232 = scmp.ne.s32.totalorder %s227, %s229
      %p233 = scmp.eq.s32.totalorder %s36, 0
      %p234 = por %p232, %p233
      %p235 = scmp.ne.s32.totalorder %s227, %s229
      %p236 = scmp.eq.s32.totalorder %s41, 1
      %p237 = por %p235, %p236
      %p238 = scmp.ne.s32.totalorder %s229, %s230
      %p239 = scmp.eq.s32.totalorder %s41, 0
      %p240 = por %p238, %p239
      %p241 = scmp.ne.s32.totalorder %s229, %s230
      %p242 = scmp.eq.s32.totalorder %s42, 1
      %p243 = por %p241, %p242
      %p245 = scmp.ne.s32.totalorder %s230, %s244
      %p246 = scmp.eq.s32.totalorder %s42, 0
      %p247 = por %p245, %p246
      %s249 = sadd.s32 %s248, 1
      %p252 = scmp.eq.s32.totalorder %s36, 1
      %p253 = scmp.ne.s32.totalorder %s248, %s250
      %p254 = scmp.eq.s32.totalorder %s36, 0
      %p255 = por %p253, %p254
      %p256 = scmp.ne.s32.totalorder %s248, %s250
      %p257 = scmp.eq.s32.totalorder %s41, 1
      %p258 = por %p256, %p257
      %p259 = scmp.ne.s32.totalorder %s250, %s251
      %p260 = scmp.eq.s32.totalorder %s41, 0
      %p261 = por %p259, %p260
      %p262 = scmp.ne.s32.totalorder %s250, %s251
      %p263 = scmp.eq.s32.totalorder %s42, 1
      %p264 = por %p262, %p263
      %p266 = scmp.ne.s32.totalorder %s251, %s265
      %p267 = scmp.eq.s32.totalorder %s42, 0
      %p268 = por %p266, %p267
      %s270 = sadd.s32 %s269, 1
      %p273 = scmp.eq.s32.totalorder %s36, 1
      %p274 = scmp.ne.s32.totalorder %s269, %s271
      %p275 = scmp.eq.s32.totalorder %s36, 0
      %p276 = por %p274, %p275
      %p277 = scmp.ne.s32.totalorder %s269, %s271
      %p278 = scmp.eq.s32.totalorder %s41, 1
      %p279 = por %p277, %p278
      %p280 = scmp.ne.s32.totalorder %s271, %s272
      %p281 = scmp.eq.s32.totalorder %s41, 0
      %p282 = por %p280, %p281
      %p283 = scmp.ne.s32.totalorder %s271, %s272
      %p284 = scmp.eq.s32.totalorder %s42, 1
      %p285 = por %p283, %p284
      %p287 = scmp.ne.s32.totalorder %s272, %s286
      %p288 = scmp.eq.s32.totalorder %s42, 0
      %p289 = por %p287, %p288
      %s291 = sadd.s32 %s290, 1
      %p294 = scmp.eq.s32.totalorder %s36, 1
      %p295 = scmp.ne.s32.totalorder %s290, %s292
      %p296 = scmp.eq.s32.totalorder %s36, 0
      %p297 = por %p295, %p296
      %p298 = scmp.ne.s32.totalorder %s290, %s292
      %p299 = scmp.eq.s32.totalorder %s41, 1
      %p300 = por %p298, %p299
      %p301 = scmp.ne.s32.totalorder %s292, %s293
      %p302 = scmp.eq.s32.totalorder %s41, 0
      %p303 = por %p301, %p302
      %p304 = scmp.ne.s32.totalorder %s292, %s293
      %p305 = scmp.eq.s32.totalorder %s42, 1
      %p306 = por %p304, %p305
      %p308 = scmp.ne.s32.totalorder %s293, %s307
      %p309 = scmp.eq.s32.totalorder %s42, 0
      %p310 = por %p308, %p309
      %s312 = sadd.s32 %s311, 1
      %p315 = scmp.eq.s32.totalorder %s36, 1
      %p316 = scmp.ne.s32.totalorder %s311, %s313
      %p317 = scmp.eq.s32.totalorder %s36, 0
      %p318 = por %p316, %p317
      %p319 = scmp.ne.s32.totalorder %s311, %s313
      %p320 = scmp.eq.s32.totalorder %s41, 1
      %p321 = por %p319, %p320
      %p322 = scmp.ne.s32.totalorder %s313, %s314
      %p323 = scmp.eq.s32.totalorder %s41, 0
      %p324 = por %p322, %p323
      %p325 = scmp.ne.s32.totalorder %s313, %s314
      %p326 = scmp.eq.s32.totalorder %s42, 1
      %p327 = por %p325, %p326
      %p329 = scmp.ne.s32.totalorder %s314, %s328
      %p330 = scmp.eq.s32.totalorder %s42, 0
      %p331 = por %p329, %p330
      %s333 = sadd.s32 %s332, 1
      %p336 = scmp.eq.s32.totalorder %s36, 1
      %p337 = scmp.ne.s32.totalorder %s332, %s334
      %p338 = scmp.eq.s32.totalorder %s36, 0
      %p339 = por %p337, %p338
      %p340 = scmp.ne.s32.totalorder %s332, %s334
      %p341 = scmp.eq.s32.totalorder %s41, 1
      %p342 = por %p340, %p341
      %p343 = scmp.ne.s32.totalorder %s334, %s335
      %p344 = scmp.eq.s32.totalorder %s41, 0
      %p345 = por %p343, %p344
      %p346 = scmp.ne.s32.totalorder %s334, %s335
      %p347 = scmp.eq.s32.totalorder %s42, 1
      %p348 = por %p346, %p347
      %p350 = scmp.ne.s32.totalorder %s335, %s349
      %p351 = scmp.eq.s32.totalorder %s42, 0
      %p352 = por %p350, %p351
      %s354 = sadd.s32 %s353, 1
      %p357 = scmp.eq.s32.totalorder %s36, 1
      %p358 = scmp.ne.s32.totalorder %s353, %s355
      %p359 = scmp.eq.s32.totalorder %s36, 0
      %p360 = por %p358, %p359
      %p361 = scmp.ne.s32.totalorder %s353, %s355
      %p362 = scmp.eq.s32.totalorder %s41, 1
      %p363 = por %p361, %p362
      %p364 = scmp.ne.s32.totalorder %s355, %s356
      %p365 = scmp.eq.s32.totalorder %s41, 0
      %p366 = por %p364, %p365
      %p367 = scmp.ne.s32.totalorder %s355, %s356
      %p368 = scmp.eq.s32.totalorder %s42, 1
      %p369 = por %p367, %p368
      %p371 = scmp.ne.s32.totalorder %s356, %s370
      %p372 = scmp.eq.s32.totalorder %s42, 0
      %p373 = por %p371, %p372
      %s375 = sadd.s32 %s374, 1
      %p378 = scmp.eq.s32.totalorder %s36, 1
      %p379 = scmp.ne.s32.totalorder %s374, %s376
      %p380 = scmp.eq.s32.totalorder %s36, 0
      %p381 = por %p379, %p380
      %p382 = scmp.ne.s32.totalorder %s374, %s376
      %p383 = scmp.eq.s32.totalorder %s41, 1
      %p384 = por %p382, %p383
      %p385 = scmp.ne.s32.totalorder %s376, %s377
      %p386 = scmp.eq.s32.totalorder %s41, 0
      %p387 = por %p385, %p386
      %p388 = scmp.ne.s32.totalorder %s376, %s377
      %p389 = scmp.eq.s32.totalorder %s42, 1
      %p390 = por %p388, %p389
      %p392 = scmp.ne.s32.totalorder %s377, %s391
      %p393 = scmp.eq.s32.totalorder %s42, 0
      %p394 = por %p392, %p393
      %s395 = ssub.s32 %s36, %s43
      %p396 = scmp.eq.s32.totalorder %s395, 0
      %s398 = sadd.s32 %s397, 1
      %s399 = scalar_select %p396, %s397, %s398
      %p402 = pneg %p396
      %p403 = scmp.eq.s32.totalorder %s36, 1
      %p404 = por %p402, %p403
      %p405 = scmp.ne.s32.totalorder %s397, %s400
      %p406 = scmp.eq.s32.totalorder %s36, 0
      %p407 = por %p405, %p406
      %p408 = scmp.ne.s32.totalorder %s397, %s400
      %p409 = scmp.eq.s32.totalorder %s41, 1
      %p410 = por %p408, %p409
      %p411 = scmp.ne.s32.totalorder %s400, %s401
      %p412 = scmp.eq.s32.totalorder %s41, 0
      %p413 = por %p411, %p412
      %p414 = scmp.ne.s32.totalorder %s400, %s401
      %p415 = scmp.eq.s32.totalorder %s42, 1
      %p416 = por %p414, %p415
      %p418 = scmp.ne.s32.totalorder %s401, %s417
      %p419 = scmp.eq.s32.totalorder %s42, 0
      %p420 = por %p418, %p419
      %s421 = ssub.s32 %s36, %s43
      %p422 = scmp.eq.s32.totalorder %s421, 0
      %s424 = sadd.s32 %s423, 1
      %s425 = scalar_select %p422, %s423, %s424
      %p428 = pneg %p422
      %p429 = scmp.eq.s32.totalorder %s36, 1
      %p430 = por %p428, %p429
      %p431 = scmp.ne.s32.totalorder %s423, %s426
      %p432 = scmp.eq.s32.totalorder %s36, 0
      %p433 = por %p431, %p432
      %p434 = scmp.ne.s32.totalorder %s423, %s426
      %p435 = scmp.eq.s32.totalorder %s41, 1
      %p436 = por %p434, %p435
      %p437 = scmp.ne.s32.totalorder %s426, %s427
      %p438 = scmp.eq.s32.totalorder %s41, 0
      %p439 = por %p437, %p438
      %p440 = scmp.ne.s32.totalorder %s426, %s427
      %p441 = scmp.eq.s32.totalorder %s42, 1
      %p442 = por %p440, %p441
      %p444 = scmp.ne.s32.totalorder %s427, %s443
      %p445 = scmp.eq.s32.totalorder %s42, 0
      %p446 = por %p444, %p445
      %p447 = scmp.le.s32.totalorder 1, %s36
      %p448 = scmp.lt.s32.totalorder %s36, 3
      %p449 = pnand %p447, %p448
      %p450 = pneg %p449
      // Predicated region
      $region9: #{tpu_custom_call.1} parent=5 // pred_check
        _
      $region10: #{tpu_custom_call.1} parent=5 // pred_check_branch
        %452 = sbr.rel (%p449) target = $region12
      $region11: #{tpu_custom_call.1} parent=5 // pred_region
        %s453 = ssub.s32 %s36, 1
        // Predicated region
        $region13: #{tpu_custom_call.1} parent=11 // pred_check
          %p454 = pneg %p135
        $region14: #{tpu_custom_call.1} parent=11 // pred_check_branch
          %456 = sbr.rel (%p454) target = $region16
        $region15: #{tpu_custom_call.1} parent=11 // pred_region
          _
        $region16: #{tpu_custom_call.1} parent=11 // pred_fallthru
          _
        // Predicated region
        $region17: #{tpu_custom_call.1} parent=11 // pred_check
          %p457 = pneg %p156
        $region18: #{tpu_custom_call.1} parent=11 // pred_check_branch
          %459 = sbr.rel (%p457) target = $region20
        $region19: #{tpu_custom_call.1} parent=11 // pred_region
          _
        $region20: #{tpu_custom_call.1} parent=11 // pred_fallthru
          _
        // Predicated region
        $region21: #{tpu_custom_call.1} parent=11 // pred_check
          %p460 = pneg %p177
        $region22: #{tpu_custom_call.1} parent=11 // pred_check_branch
          %462 = sbr.rel (%p460) target = $region24
        $region23: #{tpu_custom_call.1} parent=11 // pred_region
          _
        $region24: #{tpu_custom_call.1} parent=11 // pred_fallthru
          _
        // Predicated region
        $region25: #{tpu_custom_call.1} parent=11 // pred_check
          %p463 = pneg %p198
        $region26: #{tpu_custom_call.1} parent=11 // pred_check_branch
          %465 = sbr.rel (%p463) target = $region28
        $region27: #{tpu_custom_call.1} parent=11 // pred_region
          _
        $region28: #{tpu_custom_call.1} parent=11 // pred_fallthru
          _
        // Predicated region
        $region29: #{tpu_custom_call.1} parent=11 // pred_check
          %p466 = pneg %p219
        $region30: #{tpu_custom_call.1} parent=11 // pred_check_branch
          %468 = sbr.rel (%p466) target = $region32
        $region31: #{tpu_custom_call.1} parent=11 // pred_region
          _
        $region32: #{tpu_custom_call.1} parent=11 // pred_fallthru
          _
        // Predicated region
        $region33: #{tpu_custom_call.1} parent=11 // pred_check
          %p469 = pneg %p240
        $region34: #{tpu_custom_call.1} parent=11 // pred_check_branch
          %471 = sbr.rel (%p469) target = $region36
        $region35: #{tpu_custom_call.1} parent=11 // pred_region
          _
        $region36: #{tpu_custom_call.1} parent=11 // pred_fallthru
          _
        // Predicated region
        $region37: #{tpu_custom_call.1} parent=11 // pred_check
          %p472 = pneg %p261
        $region38: #{tpu_custom_call.1} parent=11 // pred_check_branch
          %474 = sbr.rel (%p472) target = $region40
        $region39: #{tpu_custom_call.1} parent=11 // pred_region
          _
        $region40: #{tpu_custom_call.1} parent=11 // pred_fallthru
          _
        // Predicated region
        $region41: #{tpu_custom_call.1} parent=11 // pred_check
          %p475 = pneg %p282
        $region42: #{tpu_custom_call.1} parent=11 // pred_check_branch
          %477 = sbr.rel (%p475) target = $region44
        $region43: #{tpu_custom_call.1} parent=11 // pred_region
          _
        $region44: #{tpu_custom_call.1} parent=11 // pred_fallthru
          _
        // Predicated region
        $region45: #{tpu_custom_call.1} parent=11 // pred_check
          %p478 = pneg %p303
        $region46: #{tpu_custom_call.1} parent=11 // pred_check_branch
          %480 = sbr.rel (%p478) target = $region48
        $region47: #{tpu_custom_call.1} parent=11 // pred_region
          _
        $region48: #{tpu_custom_call.1} parent=11 // pred_fallthru
          _
        // Predicated region
        $region49: #{tpu_custom_call.1} parent=11 // pred_check
          %p481 = pneg %p324
        $region50: #{tpu_custom_call.1} parent=11 // pred_check_branch
          %483 = sbr.rel (%p481) target = $region52
        $region51: #{tpu_custom_call.1} parent=11 // pred_region
          _
        $region52: #{tpu_custom_call.1} parent=11 // pred_fallthru
          _
        // Predicated region
        $region53: #{tpu_custom_call.1} parent=11 // pred_check
          %p484 = pneg %p345
        $region54: #{tpu_custom_call.1} parent=11 // pred_check_branch
          %486 = sbr.rel (%p484) target = $region56
        $region55: #{tpu_custom_call.1} parent=11 // pred_region
          _
        $region56: #{tpu_custom_call.1} parent=11 // pred_fallthru
          _
        // Predicated region
        $region57: #{tpu_custom_call.1} parent=11 // pred_check
          %p487 = pneg %p366
        $region58: #{tpu_custom_call.1} parent=11 // pred_check_branch
          %489 = sbr.rel (%p487) target = $region60
        $region59: #{tpu_custom_call.1} parent=11 // pred_region
          _
        $region60: #{tpu_custom_call.1} parent=11 // pred_fallthru
          _
        // Predicated region
        $region61: #{tpu_custom_call.1} parent=11 // pred_check
          %p490 = pneg %p387
        $region62: #{tpu_custom_call.1} parent=11 // pred_check_branch
          %492 = sbr.rel (%p490) target = $region64
        $region63: #{tpu_custom_call.1} parent=11 // pred_region
          _
        $region64: #{tpu_custom_call.1} parent=11 // pred_fallthru
          _
      $region12: #{tpu_custom_call.1} parent=5 // pred_fallthru
        _
      %p493 = scmp.lt.s32.totalorder %s36, 2
      // Predicated region
      $region65: #{tpu_custom_call.1} parent=5 // pred_check
        %p494 = pneg %p493
      $region66: #{tpu_custom_call.1} parent=5 // pred_check_branch
        %496 = sbr.rel (%p494) target = $region68
      $region67: #{tpu_custom_call.1} parent=5 // pred_region
        // Predicated region
        $region69: #{tpu_custom_call.1} parent=67 // pred_check
          %p497 = pneg %p56
        $region70: #{tpu_custom_call.1} parent=67 // pred_check_branch
          %499 = sbr.rel (%p497) target = $region72
        $region71: #{tpu_custom_call.1} parent=67 // pred_region
          %s500 = sand.u32 %s46, 1
          %s501 = scalar_lea.sflag [#allocation3], %s500
          %s502 = sand.u32 %s46, 1
          %s503 = smul.addr %s502, 8
          %s504 = scalar_lea.vmem [#allocation2], %s503
          %s506 = ssub.s32 128, 128
          %507 = vsyncadd %s501, %s506
          %s508 = smul.addr %s36, 128
          %s509 = scalar_lea.hbm %s0, %s508
          %s511 = sshll.u32 %s504, 4
          %s512 = int_to_ptr.vmem [resolvable:$true] %s511
          %514 = dma.hbm_to_vmem [thread:$0]  %s509, 128, %s512, %s501
        $region72: #{tpu_custom_call.1} parent=67 // pred_fallthru
          _
        // Predicated region
        $region73: #{tpu_custom_call.1} parent=67 // pred_check
          %p515 = pneg %p82
        $region74: #{tpu_custom_call.1} parent=67 // pred_check_branch
          %517 = sbr.rel (%p515) target = $region76
        $region75: #{tpu_custom_call.1} parent=67 // pred_region
          %s518 = sand.u32 %s36, 1
          %s519 = scalar_lea.sflag [#allocation6], %s518
          %s520 = sand.u32 %s72, 1
          %s521 = smul.addr %s520, 8
          %s522 = scalar_lea.vmem [#allocation5], %s521
          %s524 = ssub.s32 128, 128
          %525 = vsyncadd %s519, %s524
          %s526 = smul.addr %s36, 128
          %s527 = scalar_lea.hbm %s1, %s526
          %s529 = sshll.u32 %s522, 4
          %s530 = int_to_ptr.vmem [resolvable:$true] %s529
          %532 = dma.hbm_to_vmem [thread:$0]  %s527, 128, %s530, %s519
        $region76: #{tpu_custom_call.1} parent=67 // pred_fallthru
          _
        // Predicated region
        $region77: #{tpu_custom_call.1} parent=67 // pred_check
          %p533 = pneg %p108
        $region78: #{tpu_custom_call.1} parent=67 // pred_check_branch
          %535 = sbr.rel (%p533) target = $region80
        $region79: #{tpu_custom_call.1} parent=67 // pred_region
          %s536 = sand.u32 %s36, 1
          %s537 = scalar_lea.sflag [#allocation6], %s536
          %s538 = sand.u32 %s98, 1
          %s539 = smul.addr %s538, 8
          %s540 = scalar_lea.vmem [#allocation7], %s539
          %s542 = ssub.s32 128, 128
          %543 = vsyncadd %s537, %s542
          %s544 = smul.addr %s36, 128
          %s545 = scalar_lea.hbm %s2, %s544
          %s547 = sshll.u32 %s540, 4
          %s548 = int_to_ptr.vmem [resolvable:$true] %s547
          %550 = dma.hbm_to_vmem [thread:$0]  %s545, 128, %s548, %s537
        $region80: #{tpu_custom_call.1} parent=67 // pred_fallthru
          _
      $region68: #{tpu_custom_call.1} parent=5 // pred_fallthru
        _
      %p551 = scmp.le.s32.totalorder 1, %s36
      %p552 = scmp.lt.s32.totalorder %s36, 3
      %p553 = pnand %p551, %p552
      %p554 = pneg %p553
      // Predicated region
      $region81: #{tpu_custom_call.1} parent=5 // pred_check
        _
      $region82: #{tpu_custom_call.1} parent=5 // pred_check_branch
        %556 = sbr.rel (%p553) target = $region84
      $region83: #{tpu_custom_call.1} parent=5 // pred_region
        %s557 = ssub.s32 %s36, 1
        %s558 = sand.u32 %s49, 1
        %s559 = scalar_lea.sflag [#allocation3], %s558
        %s560 = sand.u32 %s49, 1
        %s561 = smul.addr %s560, 8
        %s562 = scalar_lea.vmem [#allocation2], %s561
        // Predicated region
        $region85: #{tpu_custom_call.1} parent=83 // pred_check
          %p563 = pneg %p62
        $region86: #{tpu_custom_call.1} parent=83 // pred_check_branch
          %565 = sbr.rel (%p563) target = $region88
        $region87: #{tpu_custom_call.1} parent=83 // pred_region
          %566 = dma.done %s559, 128
        $region88: #{tpu_custom_call.1} parent=83 // pred_fallthru
          _
        %s567 = sand.u32 %s41, 1
        %s568 = scalar_lea.sflag [#allocation6], %s567
        %s569 = sand.u32 %s75, 1
        %s570 = smul.addr %s569, 8
        %s571 = scalar_lea.vmem [#allocation5], %s570
        // Predicated region
        $region89: #{tpu_custom_call.1} parent=83 // pred_check
          %p572 = pneg %p88
        $region90: #{tpu_custom_call.1} parent=83 // pred_check_branch
          %574 = sbr.rel (%p572) target = $region92
        $region91: #{tpu_custom_call.1} parent=83 // pred_region
          %575 = dma.done %s568, 128
        $region92: #{tpu_custom_call.1} parent=83 // pred_fallthru
          _
        %s576 = sand.u32 %s41, 1
        %s577 = scalar_lea.sflag [#allocation6], %s576
        %s578 = sand.u32 %s101, 1
        %s579 = smul.addr %s578, 8
        %s580 = scalar_lea.vmem [#allocation7], %s579
        // Predicated region
        $region93: #{tpu_custom_call.1} parent=83 // pred_check
          %p581 = pneg %p114
        $region94: #{tpu_custom_call.1} parent=83 // pred_check_branch
          %583 = sbr.rel (%p581) target = $region96
        $region95: #{tpu_custom_call.1} parent=83 // pred_region
          %584 = dma.done %s577, 128
        $region96: #{tpu_custom_call.1} parent=83 // pred_fallthru
          _
        %s585 = sand.u32 %s49, 1
        %s586 = scalar_lea.sflag [#allocation3], %s585
        %s587 = sand.u32 %s49, 1
        %s588 = smul.addr %s587, 8
        %s589 = scalar_lea.vmem [#allocation2], %s588
        %p590 = pneg %p62
        %p591 = pneg %p59
        %s592 = sand.u32 %s41, 1
        %s593 = scalar_lea.sflag [#allocation6], %s592
        %s594 = sand.u32 %s75, 1
        %s595 = smul.addr %s594, 8
        %s596 = scalar_lea.vmem [#allocation5], %s595
        %p597 = pneg %p88
        %p598 = pneg %p85
        %s599 = sand.u32 %s41, 1
        %s600 = scalar_lea.sflag [#allocation6], %s599
        %s601 = sand.u32 %s101, 1
        %s602 = smul.addr %s601, 8
        %s603 = scalar_lea.vmem [#allocation7], %s602
        %p604 = pneg %p114
        %p605 = pneg %p111
        %p606 = pneg %p135
        %p607 = pneg %p132
        %p608 = pneg %p156
        %p609 = pneg %p153
        %p610 = pneg %p177
        %p611 = pneg %p174
        %p612 = pneg %p198
        %p613 = pneg %p195
        %p614 = pneg %p219
        %p615 = pneg %p216
        %p616 = pneg %p240
        %p617 = pneg %p237
        %p618 = pneg %p261
        %p619 = pneg %p258
        %p620 = pneg %p282
        %p621 = pneg %p279
        %p622 = pneg %p303
        %p623 = pneg %p300
        %p624 = pneg %p324
        %p625 = pneg %p321
        %p626 = pneg %p345
        %p627 = pneg %p342
        %p628 = pneg %p366
        %p629 = pneg %p363
        %p630 = pneg %p387
        %p631 = pneg %p384
        %p632 = pneg %p413
        %p633 = pneg %p410
        %s634 = sand.u32 %s400, 1
        %s635 = scalar_lea.sflag [#allocation4], %s634
        %s636 = sand.u32 %s400, 1
        %s637 = smul.addr %s636, 8
        %s638 = scalar_lea.vmem [#allocation8], %s637
        %p639 = pneg %p439
        %p640 = pneg %p436
        %s641 = sand.u32 %s426, 1
        %s642 = scalar_lea.sflag [#allocation10], %s641
        %s643 = sand.u32 %s426, 1
        %s644 = smul.addr %s643, 16
        %s645 = scalar_lea.vmem [#allocation9], %s644
        %v646 = vld [vmem:[%s562] sm:$0xff]
        %v647 = vld [vmem:[%s571] sm:$0xff]
        %v648 = vld [vmem:[%s580] sm:$0xff]
        %v649 = vld [vmem:[%s3] sm:$0xff]
        %v650 = vld [vmem:[%s3 + $0x8] sm:$0xff]
        %v651 = vld [vmem:[%s3 + $0x10] sm:$0xff]
        %v652 = vld [vmem:[%s3 + $0x18] sm:$0xff]
        %v653 = vld [vmem:[%s4] sm:$0x1]
        %v655 = vlaneseq
        %v656 = vshrl.u32 %v655, 7
        %v657 = vsub.s32 0, %v656
        %v658 = vrot.slane %v653, %v657
        %vm660 = vcmask 261120
        %v662 = vsel %vm660, %v648, 0
        %664 = vmatprep.subr.mxu0 0.0
        %665 = vmatpush1.msra.mxu0 0.0
        %666 = vmatprep.subr.mxu0 0.0
        %667 = vmatpush1.msra.mxu0 0.0
        %668 = vmatprep.subr.mxu0 0.0
        %669 = vmatpush1.msra.mxu0 0.0
        %670 = vmatprep.subr.mxu0 0.0
        %671 = vmatpush1.msra.mxu0 0.0
        %672 = vmatprep.subr.mxu0 0.0
        %673 = vmatpush1.msra.mxu0 0.0
        %674 = vmatprep.subr.mxu0 0.0
        %675 = vmatpush1.msra.mxu0 0.0
        %676 = vmatprep.subr.mxu0 0.0
        %677 = vmatpush1.msra.mxu0 0.0
        %678 = vmatprep.subr.mxu0 0.0
        %679 = vmatpush1.msra.mxu0 0.0
        %680 = vmatprep.subr.mxu0 0.0
        %681 = vmatpush1.msra.mxu0 0.0
        %682 = vmatprep.subr.mxu0 0.0
        %683 = vmatpush1.msra.mxu0 0.0
        %684 = vmatprep.subr.mxu0 0.0
        %685 = vmatpush1.msra.mxu0 0.0
        %686 = vmatprep.subr.mxu0 0.0
        %687 = vmatpush1.msra.mxu0 0.0
        %688 = vmatprep.subr.mxu0 0.0
        %689 = vmatpush1.msra.mxu0 %v652
        %690 = vmatprep.subr.mxu0 0.0
        %691 = vmatpush1.msra.mxu0 %v651
        %692 = vmatprep.subr.mxu0 0.0
        %693 = vmatpush1.msra.mxu0 %v650
        %694 = vmatprep.subr.mxu0 0.0
        %695 = vmatpush1.msra.mxu0 %v649
        %696 = vmatprep.subr.mxu0 0.0
        %697 = vmatpush2.msra.mxu0 0.0
        %698 = vmatprep.subr.mxu0 0.0
        %699 = vmatpush2.msra.mxu0 0.0
        %700 = vmatprep.subr.mxu0 0.0
        %701 = vmatpush2.msra.mxu0 0.0
        %702 = vmatprep.subr.mxu0 0.0
        %703 = vmatpush2.msra.mxu0 0.0
        %704 = vmatprep.subr.mxu0 0.0
        %705 = vmatpush2.msra.mxu0 0.0
        %706 = vmatprep.subr.mxu0 0.0
        %707 = vmatpush2.msra.mxu0 0.0
        %708 = vmatprep.subr.mxu0 0.0
        %709 = vmatpush2.msra.mxu0 0.0
        %710 = vmatprep.subr.mxu0 0.0
        %711 = vmatpush2.msra.mxu0 0.0
        %712 = vmatprep.subr.mxu0 0.0
        %713 = vmatpush2.msra.mxu0 0.0
        %714 = vmatprep.subr.mxu0 0.0
        %715 = vmatpush2.msra.mxu0 0.0
        %716 = vmatprep.subr.mxu0 0.0
        %717 = vmatpush2.msra.mxu0 0.0
        %718 = vmatprep.subr.mxu0 0.0
        %719 = vmatpush2.msra.mxu0 0.0
        %720 = vmatprep.subr.mxu0 0.0
        %721 = vmatpush2.msra.mxu0 0.0
        %722 = vmatprep.subr.mxu0 0.0
        %723 = vmatpush2.msra.mxu0 0.0
        %724 = vmatprep.subr.mxu0 0.0
        %725 = vmatpush2.msra.mxu0 0.0
        %726 = vmatprep.subr.mxu0 0.0
        %727 = vmatpush2.msra.mxu0 0.0
        %728 = vmatprep.mubr.f32.mxu0 0.0
        %729 = vmatmul.mubr.f32.gmra.mxu0 %v662
        %v730 = vpop.f32.mrf.mxu0
        %v731 = vadd.f32 %v658, %v730
        %v732 = vpop.f32.mrf.mxu0
        %733 = vdwg.mxu0
        %v734 = vsub.f32 %v646, %v647
        %v735 = vld [vmem:[%s5] sm:$0xff]
        %v736 = vld [vmem:[%s5 + $0x8] sm:$0xff]
        %v737 = vld [vmem:[%s5 + $0x10] sm:$0xff]
        %v738 = vld [vmem:[%s5 + $0x18] sm:$0xff]
        %v739 = vld [vmem:[%s6] sm:$0xff]
        %v740 = vld [vmem:[%s6 + $0x8] sm:$0xff]
        %v741 = vld [vmem:[%s6 + $0x10] sm:$0xff]
        %v742 = vld [vmem:[%s6 + $0x18] sm:$0xff]
        %v744 = vsel %vm660, %v647, 0
        %746 = vmatprep.subr.mxu0 0.0
        %747 = vmatpush1.msra.mxu0 0.0
        %748 = vmatprep.subr.mxu0 0.0
        %749 = vmatpush1.msra.mxu0 0.0
        %750 = vmatprep.subr.mxu0 0.0
        %751 = vmatpush1.msra.mxu0 0.0
        %752 = vmatprep.subr.mxu0 0.0
        %753 = vmatpush1.msra.mxu0 0.0
        %754 = vmatprep.subr.mxu0 0.0
        %755 = vmatpush1.msra.mxu0 0.0
        %756 = vmatprep.subr.mxu0 0.0
        %757 = vmatpush1.msra.mxu0 0.0
        %758 = vmatprep.subr.mxu0 0.0
        %759 = vmatpush1.msra.mxu0 0.0
        %760 = vmatprep.subr.mxu0 0.0
        %761 = vmatpush1.msra.mxu0 0.0
        %762 = vmatprep.subr.mxu0 0.0
        %763 = vmatpush1.msra.mxu0 0.0
        %764 = vmatprep.subr.mxu0 0.0
        %765 = vmatpush1.msra.mxu0 0.0
        %766 = vmatprep.subr.mxu0 0.0
        %767 = vmatpush1.msra.mxu0 0.0
        %768 = vmatprep.subr.mxu0 0.0
        %769 = vmatpush1.msra.mxu0 0.0
        %770 = vmatprep.subr.mxu0 0.0
        %771 = vmatpush1.msra.mxu0 %v742
        %772 = vmatprep.subr.mxu0 0.0
        %773 = vmatpush1.msra.mxu0 %v741
        %774 = vmatprep.subr.mxu0 0.0
        %775 = vmatpush1.msra.mxu0 %v740
        %776 = vmatprep.subr.mxu0 0.0
        %777 = vmatpush1.msra.mxu0 %v739
        %778 = vmatprep.subr.mxu0 0.0
        %779 = vmatpush2.msra.mxu0 0.0
        %780 = vmatprep.subr.mxu0 0.0
        %781 = vmatpush2.msra.mxu0 0.0
        %782 = vmatprep.subr.mxu0 0.0
        %783 = vmatpush2.msra.mxu0 0.0
        %784 = vmatprep.subr.mxu0 0.0
        %785 = vmatpush2.msra.mxu0 0.0
        %786 = vmatprep.subr.mxu0 0.0
        %787 = vmatpush2.msra.mxu0 0.0
        %788 = vmatprep.subr.mxu0 0.0
        %789 = vmatpush2.msra.mxu0 0.0
        %790 = vmatprep.subr.mxu0 0.0
        %791 = vmatpush2.msra.mxu0 0.0
        %792 = vmatprep.subr.mxu0 0.0
        %793 = vmatpush2.msra.mxu0 0.0
        %794 = vmatprep.subr.mxu0 0.0
        %795 = vmatpush2.msra.mxu0 0.0
        %796 = vmatprep.subr.mxu0 0.0
        %797 = vmatpush2.msra.mxu0 0.0
        %798 = vmatprep.subr.mxu0 0.0
        %799 = vmatpush2.msra.mxu0 0.0
        %800 = vmatprep.subr.mxu0 0.0
        %801 = vmatpush2.msra.mxu0 0.0
        %802 = vmatprep.subr.mxu0 0.0
        %803 = vmatpush2.msra.mxu0 0.0
        %804 = vmatprep.subr.mxu0 0.0
        %805 = vmatpush2.msra.mxu0 0.0
        %806 = vmatprep.subr.mxu0 0.0
        %807 = vmatpush2.msra.mxu0 0.0
        %808 = vmatprep.subr.mxu0 0.0
        %809 = vmatpush2.msra.mxu0 0.0
        %810 = vmatprep.mubr.f32.mxu0 0.0
        %811 = vmatmul.mubr.f32.gmra.mxu0 %v744
        %v812 = vpop.f32.mrf.mxu0
        %v813 = vadd.f32 0.0, %v812
        %v814 = vpop.f32.mrf.mxu0
        %815 = vdwg.mxu0
        %v817 = vsel %vm660, %v734, 0
        %819 = vmatprep.subr.mxu0 0.0
        %820 = vmatpush1.msra.mxu0 0.0
        %821 = vmatprep.subr.mxu0 0.0
        %822 = vmatpush1.msra.mxu0 0.0
        %823 = vmatprep.subr.mxu0 0.0
        %824 = vmatpush1.msra.mxu0 0.0
        %825 = vmatprep.subr.mxu0 0.0
        %826 = vmatpush1.msra.mxu0 0.0
        %827 = vmatprep.subr.mxu0 0.0
        %828 = vmatpush1.msra.mxu0 0.0
        %829 = vmatprep.subr.mxu0 0.0
        %830 = vmatpush1.msra.mxu0 0.0
        %831 = vmatprep.subr.mxu0 0.0
        %832 = vmatpush1.msra.mxu0 0.0
        %833 = vmatprep.subr.mxu0 0.0
        %834 = vmatpush1.msra.mxu0 0.0
        %835 = vmatprep.subr.mxu0 0.0
        %836 = vmatpush1.msra.mxu0 0.0
        %837 = vmatprep.subr.mxu0 0.0
        %838 = vmatpush1.msra.mxu0 0.0
        %839 = vmatprep.subr.mxu0 0.0
        %840 = vmatpush1.msra.mxu0 0.0
        %841 = vmatprep.subr.mxu0 0.0
        %842 = vmatpush1.msra.mxu0 0.0
        %843 = vmatprep.subr.mxu0 0.0
        %844 = vmatpush1.msra.mxu0 %v738
        %845 = vmatprep.subr.mxu0 0.0
        %846 = vmatpush1.msra.mxu0 %v737
        %847 = vmatprep.subr.mxu0 0.0
        %848 = vmatpush1.msra.mxu0 %v736
        %849 = vmatprep.subr.mxu0 0.0
        %850 = vmatpush1.msra.mxu0 %v735
        %851 = vmatprep.subr.mxu0 0.0
        %852 = vmatpush2.msra.mxu0 0.0
        %853 = vmatprep.subr.mxu0 0.0
        %854 = vmatpush2.msra.mxu0 0.0
        %855 = vmatprep.subr.mxu0 0.0
        %856 = vmatpush2.msra.mxu0 0.0
        %857 = vmatprep.subr.mxu0 0.0
        %858 = vmatpush2.msra.mxu0 0.0
        %859 = vmatprep.subr.mxu0 0.0
        %860 = vmatpush2.msra.mxu0 0.0
        %861 = vmatprep.subr.mxu0 0.0
        %862 = vmatpush2.msra.mxu0 0.0
        %863 = vmatprep.subr.mxu0 0.0
        %864 = vmatpush2.msra.mxu0 0.0
        %865 = vmatprep.subr.mxu0 0.0
        %866 = vmatpush2.msra.mxu0 0.0
        %867 = vmatprep.subr.mxu0 0.0
        %868 = vmatpush2.msra.mxu0 0.0
        %869 = vmatprep.subr.mxu0 0.0
        %870 = vmatpush2.msra.mxu0 0.0
        %871 = vmatprep.subr.mxu0 0.0
        %872 = vmatpush2.msra.mxu0 0.0
        %873 = vmatprep.subr.mxu0 0.0
        %874 = vmatpush2.msra.mxu0 0.0
        %875 = vmatprep.subr.mxu0 0.0
        %876 = vmatpush2.msra.mxu0 0.0
        %877 = vmatprep.subr.mxu0 0.0
        %878 = vmatpush2.msra.mxu0 0.0
        %879 = vmatprep.subr.mxu0 0.0
        %880 = vmatpush2.msra.mxu0 0.0
        %881 = vmatprep.subr.mxu0 0.0
        %882 = vmatpush2.msra.mxu0 0.0
        %883 = vmatprep.mubr.f32.mxu0 0.0
        %884 = vmatmul.mubr.f32.gmra.mxu0 %v817
        %v885 = vpop.f32.mrf.mxu0
        %v886 = vadd.f32 %v813, %v885
        %v887 = vpop.f32.mrf.mxu0
        %888 = vdwg.mxu0
        %v889 = vld [vmem:[%s7] sm:$0x1]
        %v891 = vlaneseq
        %v892 = vshrl.u32 %v891, 7
        %v893 = vsub.s32 0, %v892
        %v894 = vrot.slane %v889, %v893
        %v896 = vadd.f32 %v886, %v894
        %v897 = vxor.u32 %v896, 2147483648
        %v898 = vmul.f32 %v897, 1.442695
        %v899 = vpow.pop %v898
        %v900 = vadd.f32 %v899, 1.0
        %v901 = vrcp.pop %v900
        %v902 = vmul.f32 1.0, %v901
        %v903 = vmul.f32 %v896, %v902
        %v904 = vld [vmem:[%s8] sm:$0xff]
        %v905 = vld [vmem:[%s8 + $0x8] sm:$0xff]
        %v906 = vld [vmem:[%s8 + $0x10] sm:$0xff]
        %v907 = vld [vmem:[%s8 + $0x18] sm:$0xff]
        %v908 = vld [vmem:[%s8 + $0x20] sm:$0xff]
        %v909 = vld [vmem:[%s8 + $0x28] sm:$0xff]
        %v910 = vld [vmem:[%s8 + $0x30] sm:$0xff]
        %v911 = vld [vmem:[%s8 + $0x38] sm:$0xff]
        %v912 = vld [vmem:[%s9] sm:$0x1]
        %v914 = vlaneseq
        %v915 = vshrl.u32 %v914, 7
        %v916 = vsub.s32 0, %v915
        %v917 = vrot.slane %v912, %v916
        %vm919 = vcmask 523264
        %v921 = vsel %vm919, %v903, 0
        %923 = vmatprep.subr.mxu0 0.0
        %924 = vmatpush1.msra.mxu0 0.0
        %925 = vmatprep.subr.mxu0 0.0
        %926 = vmatpush1.msra.mxu0 0.0
        %927 = vmatprep.subr.mxu0 0.0
        %928 = vmatpush1.msra.mxu0 0.0
        %929 = vmatprep.subr.mxu0 0.0
        %930 = vmatpush1.msra.mxu0 0.0
        %931 = vmatprep.subr.mxu0 0.0
        %932 = vmatpush1.msra.mxu0 0.0
        %933 = vmatprep.subr.mxu0 0.0
        %934 = vmatpush1.msra.mxu0 0.0
        %935 = vmatprep.subr.mxu0 0.0
        %936 = vmatpush1.msra.mxu0 0.0
        %937 = vmatprep.subr.mxu0 0.0
        %938 = vmatpush1.msra.mxu0 0.0
        %939 = vmatprep.subr.mxu0 0.0
        %940 = vmatpush1.msra.mxu0 %v911
        %941 = vmatprep.subr.mxu0 0.0
        %942 = vmatpush1.msra.mxu0 %v910
        %943 = vmatprep.subr.mxu0 0.0
        %944 = vmatpush1.msra.mxu0 %v909
        %945 = vmatprep.subr.mxu0 0.0
        %946 = vmatpush1.msra.mxu0 %v908
        %947 = vmatprep.subr.mxu0 0.0
        %948 = vmatpush1.msra.mxu0 %v907
        %949 = vmatprep.subr.mxu0 0.0
        %950 = vmatpush1.msra.mxu0 %v906
        %951 = vmatprep.subr.mxu0 0.0
        %952 = vmatpush1.msra.mxu0 %v905
        %953 = vmatprep.subr.mxu0 0.0
        %954 = vmatpush1.msra.mxu0 %v904
        %955 = vmatprep.subr.mxu0 0.0
        %956 = vmatpush2.msra.mxu0 0.0
        %957 = vmatprep.subr.mxu0 0.0
        %958 = vmatpush2.msra.mxu0 0.0
        %959 = vmatprep.subr.mxu0 0.0
        %960 = vmatpush2.msra.mxu0 0.0
        %961 = vmatprep.subr.mxu0 0.0
        %962 = vmatpush2.msra.mxu0 0.0
        %963 = vmatprep.subr.mxu0 0.0
        %964 = vmatpush2.msra.mxu0 0.0
        %965 = vmatprep.subr.mxu0 0.0
        %966 = vmatpush2.msra.mxu0 0.0
        %967 = vmatprep.subr.mxu0 0.0
        %968 = vmatpush2.msra.mxu0 0.0
        %969 = vmatprep.subr.mxu0 0.0
        %970 = vmatpush2.msra.mxu0 0.0
        %971 = vmatprep.subr.mxu0 0.0
        %972 = vmatpush2.msra.mxu0 0.0
        %973 = vmatprep.subr.mxu0 0.0
        %974 = vmatpush2.msra.mxu0 0.0
        %975 = vmatprep.subr.mxu0 0.0
        %976 = vmatpush2.msra.mxu0 0.0
        %977 = vmatprep.subr.mxu0 0.0
        %978 = vmatpush2.msra.mxu0 0.0
        %979 = vmatprep.subr.mxu0 0.0
        %980 = vmatpush2.msra.mxu0 0.0
        %981 = vmatprep.subr.mxu0 0.0
        %982 = vmatpush2.msra.mxu0 0.0
        %983 = vmatprep.subr.mxu0 0.0
        %984 = vmatpush2.msra.mxu0 0.0
        %985 = vmatprep.subr.mxu0 0.0
        %986 = vmatpush2.msra.mxu0 0.0
        %987 = vmatprep.mubr.f32.mxu0 0.0
        %988 = vmatmul.mubr.f32.gmra.mxu0 %v921
        %v989 = vpop.f32.mrf.mxu0
        %v990 = vadd.f32 %v917, %v989
        %v991 = vpop.f32.mrf.mxu0
        %992 = vdwg.mxu0
        %v993 = vld [vmem:[%s10] sm:$0xff]
        %v994 = vld [vmem:[%s10 + $0x8] sm:$0xff]
        %v995 = vld [vmem:[%s10 + $0x10] sm:$0xff]
        %v996 = vld [vmem:[%s10 + $0x18] sm:$0xff]
        %v997 = vld [vmem:[%s10 + $0x20] sm:$0xff]
        %v998 = vld [vmem:[%s10 + $0x28] sm:$0xff]
        %v999 = vld [vmem:[%s10 + $0x30] sm:$0xff]
        %v1000 = vld [vmem:[%s10 + $0x38] sm:$0xff]
        %v1001 = vld [vmem:[%s11] sm:$0x1]
        %v1003 = vlaneseq
        %v1004 = vshrl.u32 %v1003, 7
        %v1005 = vsub.s32 0, %v1004
        %v1006 = vrot.slane %v1001, %v1005
        %1008 = vmatprep.subr.mxu0 0.0
        %1009 = vmatpush1.msra.mxu0 0.0
        %1010 = vmatprep.subr.mxu0 0.0
        %1011 = vmatpush1.msra.mxu0 0.0
        %1012 = vmatprep.subr.mxu0 0.0
        %1013 = vmatpush1.msra.mxu0 0.0
        %1014 = vmatprep.subr.mxu0 0.0
        %1015 = vmatpush1.msra.mxu0 0.0
        %1016 = vmatprep.subr.mxu0 0.0
        %1017 = vmatpush1.msra.mxu0 0.0
        %1018 = vmatprep.subr.mxu0 0.0
        %1019 = vmatpush1.msra.mxu0 0.0
        %1020 = vmatprep.subr.mxu0 0.0
        %1021 = vmatpush1.msra.mxu0 0.0
        %1022 = vmatprep.subr.mxu0 0.0
        %1023 = vmatpush1.msra.mxu0 0.0
        %1024 = vmatprep.subr.mxu0 0.0
        %1025 = vmatpush1.msra.mxu0 %v1000
        %1026 = vmatprep.subr.mxu0 0.0
        %1027 = vmatpush1.msra.mxu0 %v999
        %1028 = vmatprep.subr.mxu0 0.0
        %1029 = vmatpush1.msra.mxu0 %v998
        %1030 = vmatprep.subr.mxu0 0.0
        %1031 = vmatpush1.msra.mxu0 %v997
        %1032 = vmatprep.subr.mxu0 0.0
        %1033 = vmatpush1.msra.mxu0 %v996
        %1034 = vmatprep.subr.mxu0 0.0
        %1035 = vmatpush1.msra.mxu0 %v995
        %1036 = vmatprep.subr.mxu0 0.0
        %1037 = vmatpush1.msra.mxu0 %v994
        %1038 = vmatprep.subr.mxu0 0.0
        %1039 = vmatpush1.msra.mxu0 %v993
        %1040 = vmatprep.subr.mxu0 0.0
        %1041 = vmatpush2.msra.mxu0 0.0
        %1042 = vmatprep.subr.mxu0 0.0
        %1043 = vmatpush2.msra.mxu0 0.0
        %1044 = vmatprep.subr.mxu0 0.0
        %1045 = vmatpush2.msra.mxu0 0.0
        %1046 = vmatprep.subr.mxu0 0.0
        %1047 = vmatpush2.msra.mxu0 0.0
        %1048 = vmatprep.subr.mxu0 0.0
        %1049 = vmatpush2.msra.mxu0 0.0
        %1050 = vmatprep.subr.mxu0 0.0
        %1051 = vmatpush2.msra.mxu0 0.0
        %1052 = vmatprep.subr.mxu0 0.0
        %1053 = vmatpush2.msra.mxu0 0.0
        %1054 = vmatprep.subr.mxu0 0.0
        %1055 = vmatpush2.msra.mxu0 0.0
        %1056 = vmatprep.subr.mxu0 0.0
        %1057 = vmatpush2.msra.mxu0 0.0
        %1058 = vmatprep.subr.mxu0 0.0
        %1059 = vmatpush2.msra.mxu0 0.0
        %1060 = vmatprep.subr.mxu0 0.0
        %1061 = vmatpush2.msra.mxu0 0.0
        %1062 = vmatprep.subr.mxu0 0.0
        %1063 = vmatpush2.msra.mxu0 0.0
        %1064 = vmatprep.subr.mxu0 0.0
        %1065 = vmatpush2.msra.mxu0 0.0
        %1066 = vmatprep.subr.mxu0 0.0
        %1067 = vmatpush2.msra.mxu0 0.0
        %1068 = vmatprep.subr.mxu0 0.0
        %1069 = vmatpush2.msra.mxu0 0.0
        %1070 = vmatprep.subr.mxu0 0.0
        %1071 = vmatpush2.msra.mxu0 0.0
        %1072 = vmatprep.mubr.f32.mxu0 0.0
        %1073 = vmatmul.mubr.f32.gmra.mxu0 %v921
        %v1074 = vpop.f32.mrf.mxu0
        %v1075 = vadd.f32 %v1006, %v1074
        %v1076 = vpop.f32.mrf.mxu0
        %1077 = vdwg.mxu0
        %v1078 = vxor.u32 %v990, 2147483648
        %v1079 = vmul.f32 %v1078, 1.442695
        %v1080 = vpow.pop %v1079
        %v1081 = vadd.f32 %v1080, 1.0
        %v1082 = vrcp.pop %v1081
        %v1083 = vmul.f32 1.0, %v1082
        %v1084 = vmul.f32 %v1083, %v731
        %v1085 = vadd.f32 %v1084, %v646
        %v1086 = vxor.u32 %v1075, 2147483648
        %v1087 = vmul.f32 %v1086, 1.442695
        %v1088 = vpow.pop %v1087
        %v1089 = vadd.f32 %v1088, 1.0
        %v1090 = vrcp.pop %v1089
        %v1091 = vmul.f32 1.0, %v1090
        %v1092 = vmul.f32 %v1091, %v731
        %v1093 = vadd.f32 %v1092, %v647
        %1094 = vst.msk [vmem:[%s638] sm:$0xff] %vm660, %v1093
        %v1095 = vld [vmem:[%s12] sm:$0x1]
        %v1096 = vld [vmem:[%s13] sm:$0x1]
        %v1097 = vsel %vm660, %v1085, 0.0
        %1098 = vadd.xlane.f32.xlu0 %v1097
        %v1099 = vpop.xlane.xlu0 %1098
        %v1100 = vrcp.pop 32.0
        %v1101 = vmul.f32 %v1099, %v1100
        %v1102 = vsub.f32 %v1085, %v1101
        %v1103 = vmul.f32 %v1102, %v1102
        %v1104 = vsel %vm660, %v1103, 0.0
        %1105 = vadd.xlane.f32.xlu0 %v1104
        %v1106 = vpop.xlane.xlu0 %1105
        %v1107 = vmul.f32 %v1106, %v1100
        %v1108 = vadd.f32 %v1107, 1e-05
        %v1109 = vrsqrt.pop %v1108
        %v1110 = vmul.f32 %v1102, %v1109
        %v1112 = vlaneseq
        %v1113 = vshrl.u32 %v1112, 7
        %v1114 = vsub.s32 0, %v1113
        %v1115 = vrot.slane %v1095, %v1114
        %v1117 = vmul.f32 %v1110, %v1115
        %v1119 = vlaneseq
        %v1120 = vshrl.u32 %v1119, 7
        %v1121 = vsub.s32 0, %v1120
        %v1122 = vrot.slane %v1096, %v1121
        %v1124 = vadd.f32 %v1117, %v1122
        %v1125 = vld [vmem:[%s14] sm:$0xff]
        %v1126 = vld [vmem:[%s14 + $0x8] sm:$0xff]
        %v1127 = vld [vmem:[%s14 + $0x10] sm:$0xff]
        %v1128 = vld [vmem:[%s14 + $0x18] sm:$0xff]
        %v1129 = vld [vmem:[%s14 + $0x20] sm:$0xff]
        %v1130 = vld [vmem:[%s14 + $0x28] sm:$0xff]
        %v1131 = vld [vmem:[%s14 + $0x30] sm:$0xff]
        %v1132 = vld [vmem:[%s14 + $0x38] sm:$0xff]
        %v1133 = vld [vmem:[%s15] sm:$0x3]
        %v1135 = vlaneseq
        %v1136 = vshrl.u32 %v1135, 7
        %v1137 = vsub.s32 0, %v1136
        %v1138 = vrot.slane %v1133, %v1137
        %v1139 = vlaneseq
        %v1140 = vshrl.u32 %v1139, 7
        %v1141 = vsub.s32 1, %v1140
        %v1142 = vrot.slane %v1133, %v1141
        %v1146 = vsel %vm660, %v1124, 0
        %1148 = vmatprep.subr.mxu0 0.0
        %1149 = vmatpush1.msra.mxu0 0.0
        %1150 = vmatprep.subr.mxu0 0.0
        %1151 = vmatpush1.msra.mxu0 0.0
        %1152 = vmatprep.subr.mxu0 0.0
        %1153 = vmatpush1.msra.mxu0 0.0
        %1154 = vmatprep.subr.mxu0 0.0
        %1155 = vmatpush1.msra.mxu0 0.0
        %1156 = vmatprep.subr.mxu0 0.0
        %1157 = vmatpush1.msra.mxu0 0.0
        %1158 = vmatprep.subr.mxu0 0.0
        %1159 = vmatpush1.msra.mxu0 0.0
        %1160 = vmatprep.subr.mxu0 0.0
        %1161 = vmatpush1.msra.mxu0 0.0
        %1162 = vmatprep.subr.mxu0 0.0
        %1163 = vmatpush1.msra.mxu0 0.0
        %1164 = vmatprep.subr.mxu0 0.0
        %1165 = vmatpush1.msra.mxu0 0.0
        %1166 = vmatprep.subr.mxu0 0.0
        %1167 = vmatpush1.msra.mxu0 0.0
        %1168 = vmatprep.subr.mxu0 0.0
        %1169 = vmatpush1.msra.mxu0 0.0
        %1170 = vmatprep.subr.mxu0 0.0
        %1171 = vmatpush1.msra.mxu0 0.0
        %1172 = vmatprep.subr.mxu0 %v1132
        %1173 = vmatpush1.msra.mxu0 %v1131
        %1174 = vmatprep.subr.mxu0 %v1130
        %1175 = vmatpush1.msra.mxu0 %v1129
        %1176 = vmatprep.subr.mxu0 %v1128
        %1177 = vmatpush1.msra.mxu0 %v1127
        %1178 = vmatprep.subr.mxu0 %v1126
        %1179 = vmatpush1.msra.mxu0 %v1125
        %1180 = vmatprep.subr.mxu0 0.0
        %1181 = vmatpush2.msra.mxu0 0.0
        %1182 = vmatprep.subr.mxu0 0.0
        %1183 = vmatpush2.msra.mxu0 0.0
        %1184 = vmatprep.subr.mxu0 0.0
        %1185 = vmatpush2.msra.mxu0 0.0
        %1186 = vmatprep.subr.mxu0 0.0
        %1187 = vmatpush2.msra.mxu0 0.0
        %1188 = vmatprep.subr.mxu0 0.0
        %1189 = vmatpush2.msra.mxu0 0.0
        %1190 = vmatprep.subr.mxu0 0.0
        %1191 = vmatpush2.msra.mxu0 0.0
        %1192 = vmatprep.subr.mxu0 0.0
        %1193 = vmatpush2.msra.mxu0 0.0
        %1194 = vmatprep.subr.mxu0 0.0
        %1195 = vmatpush2.msra.mxu0 0.0
        %1196 = vmatprep.subr.mxu0 0.0
        %1197 = vmatpush2.msra.mxu0 0.0
        %1198 = vmatprep.subr.mxu0 0.0
        %1199 = vmatpush2.msra.mxu0 0.0
        %1200 = vmatprep.subr.mxu0 0.0
        %1201 = vmatpush2.msra.mxu0 0.0
        %1202 = vmatprep.subr.mxu0 0.0
        %1203 = vmatpush2.msra.mxu0 0.0
        %1204 = vmatprep.subr.mxu0 0.0
        %1205 = vmatpush2.msra.mxu0 0.0
        %1206 = vmatprep.subr.mxu0 0.0
        %1207 = vmatpush2.msra.mxu0 0.0
        %1208 = vmatprep.subr.mxu0 0.0
        %1209 = vmatpush2.msra.mxu0 0.0
        %1210 = vmatprep.subr.mxu0 0.0
        %1211 = vmatpush2.msra.mxu0 0.0
        %1212 = vmatprep.mubr.f32.mxu0 0.0
        %1213 = vmatmul.mubr.f32.gmra.mxu0 %v1146
        %v1214 = vpop.f32.mrf.mxu0
        %v1215 = vadd.f32 %v1138, %v1214
        %v1216 = vpop.f32.mrf.mxu0
        %v1217 = vadd.f32 %v1142, %v1216
        %1218 = vdwg.mxu0
        %v1219 = vxor.u32 %v1215, 2147483648
        %v1220 = vxor.u32 %v1217, 2147483648
        %v1221 = vmul.f32 %v1219, 1.442695
        %v1222 = vpow.pop %v1221
        %v1223 = vmul.f32 %v1220, 1.442695
        %v1224 = vpow.pop %v1223
        %v1225 = vadd.f32 %v1222, 1.0
        %v1226 = vadd.f32 %v1224, 1.0
        %v1227 = vrcp.pop %v1225
        %v1228 = vmul.f32 1.0, %v1227
        %v1229 = vrcp.pop %v1226
        %v1230 = vmul.f32 1.0, %v1229
        %1231 = vst [vmem:[%s645] sm:$0xff] %v1228
        %vm1232 = vcmask 556032
        %1233 = vst.msk [vmem:[%s645 + $0x8] sm:$0xff] %vm1232, %v1230
        %s1234 = sand.u32 %s400, 1
        %s1235 = scalar_lea.sflag [#allocation4], %s1234
        %s1236 = sand.u32 %s400, 1
        %s1237 = smul.addr %s1236, 8
        %s1238 = scalar_lea.vmem [#allocation8], %s1237
        %s1239 = sand.u32 %s426, 1
        %s1240 = scalar_lea.sflag [#allocation10], %s1239
        %s1241 = sand.u32 %s426, 1
        %s1242 = smul.addr %s1241, 16
        %s1243 = scalar_lea.vmem [#allocation9], %s1242
        // Predicated region
        $region97: #{tpu_custom_call.1} parent=83 // pred_check
          %p1244 = pneg %p410
        $region98: #{tpu_custom_call.1} parent=83 // pred_check_branch
          %1246 = sbr.rel (%p1244) target = $region100
        $region99: #{tpu_custom_call.1} parent=83 // pred_region
          %s1248 = ssub.s32 128, 128
          %1249 = vsyncadd %s1235, %s1248
          %s1250 = smul.addr %s41, 128
          %s1251 = scalar_lea.hbm %s16, %s1250
          %s1253 = sshll.u32 %s1238, 4
          %s1254 = int_to_ptr.vmem [resolvable:$true] %s1253
          %1256 = dma.vmem_to_hbm [thread:$0]  %s1254, 128, %s1251, %s1235
        $region100: #{tpu_custom_call.1} parent=83 // pred_fallthru
          _
        // Predicated region
        $region101: #{tpu_custom_call.1} parent=83 // pred_check
          %p1257 = pneg %p436
        $region102: #{tpu_custom_call.1} parent=83 // pred_check_branch
          %1259 = sbr.rel (%p1257) target = $region104
        $region103: #{tpu_custom_call.1} parent=83 // pred_region
          %s1261 = ssub.s32 256, 256
          %1262 = vsyncadd %s1240, %s1261
          %s1263 = smul.addr %s41, 2
          %s1264 = smul.addr %s1263, 128
          %s1265 = scalar_lea.hbm %s17, %s1264
          %s1267 = sshll.u32 %s1243, 4
          %s1268 = int_to_ptr.vmem [resolvable:$true] %s1267
          %1270 = dma.vmem_to_hbm [thread:$0]  %s1268, 256, %s1265, %s1240
        $region104: #{tpu_custom_call.1} parent=83 // pred_fallthru
          _
      $region84: #{tpu_custom_call.1} parent=5 // pred_fallthru
        _
      %p1271 = scmp.le.s32.totalorder 2, %s36
      // Predicated region
      $region105: #{tpu_custom_call.1} parent=5 // pred_check
        %p1272 = pneg %p1271
      $region106: #{tpu_custom_call.1} parent=5 // pred_check_branch
        %1274 = sbr.rel (%p1272) target = $region108
      $region107: #{tpu_custom_call.1} parent=5 // pred_region
        %s1275 = ssub.s32 %s36, 2
        // Predicated region
        $region109: #{tpu_custom_call.1} parent=107 // pred_check
          %p1276 = pneg %p416
        $region110: #{tpu_custom_call.1} parent=107 // pred_check_branch
          %1278 = sbr.rel (%p1276) target = $region112
        $region111: #{tpu_custom_call.1} parent=107 // pred_region
          %s1279 = sand.u32 %s401, 1
          %s1280 = scalar_lea.sflag [#allocation4], %s1279
          %s1281 = sand.u32 %s401, 1
          %s1282 = smul.addr %s1281, 8
          %s1283 = scalar_lea.vmem [#allocation8], %s1282
          %1284 = dma.done %s1280, 128
        $region112: #{tpu_custom_call.1} parent=107 // pred_fallthru
          _
        // Predicated region
        $region113: #{tpu_custom_call.1} parent=107 // pred_check
          %p1285 = pneg %p442
        $region114: #{tpu_custom_call.1} parent=107 // pred_check_branch
          %1287 = sbr.rel (%p1285) target = $region116
        $region115: #{tpu_custom_call.1} parent=107 // pred_region
          %s1288 = sand.u32 %s427, 1
          %s1289 = scalar_lea.sflag [#allocation10], %s1288
          %s1290 = sand.u32 %s427, 1
          %s1291 = smul.addr %s1290, 16
          %s1292 = scalar_lea.vmem [#allocation9], %s1291
          %1293 = dma.done %s1289, 256
        $region116: #{tpu_custom_call.1} parent=107 // pred_fallthru
          _
      $region108: #{tpu_custom_call.1} parent=5 // pred_fallthru
        _
    $region6: #{tpu_custom_call.1} parent=1 // loop_footer
      %s40 = sadd.s32 1, %s36
    $region7: #{tpu_custom_call.1} parent=1 // loop_footer_branch
      %35 = sbr.rel target = $region3
    $region8: #{tpu_custom_call.1} parent=1 // loop_exit
      _
    %1294 = vsyncpa [#allocation3], 1
    %s1295 = scalar_lea.sflag [#allocation3], 1
    %1296 = vsyncpa %s1295, 1
    %1297 = vsyncpa [#allocation6], 1
    %s1298 = scalar_lea.sflag [#allocation6], 1
    %1299 = vsyncpa %s1298, 1
    %1300 = vsyncpa [#allocation4], 1
    %s1301 = scalar_lea.sflag [#allocation4], 1
    %1302 = vsyncpa %s1301, 1
    %1303 = vsyncpa [#allocation10], 1
    %s1304 = scalar_lea.sflag [#allocation10], 1
    %1305 = vsyncpa %s1304, 1

</llo_original>
